<compile_context>
chip_gen: v5e
topology: v5e:2x2
jax: 0.10.0
libtpu: 0.0.40
codegen_flags: <defaults>
</compile_context>

<pallas_src>
import functools

import jax
import jax.numpy as jnp
from jax import lax
from jax.experimental import pallas as pl
from jax.experimental.pallas import tpu as pltpu


def _round_up(x, m):
    return (x + m - 1) // m * m


# ---------------------------------------------------------------------------
# Fused time-chunked LSTM recurrence + output projection.
#
#   gates  = gx[t] + h @ W_hh                 (MXU, bf16 operands -> f32 acc)
#   i,f,o  = sigmoid(gates[:, :3Hp]);  g = tanh(gates[:, 3Hp:])
#   c' = f*c + i*g ;  h' = o * tanh(c')       (VPU/EUP, f32)
#   logits[t] = h' @ W_out + b_out            (MXU, bf16 operands -> f32)
#
# Prepared gate layout is [i, f, o | g], each gate zero-padded to Hp (multiple
# of 128) so every slice is lane-aligned. Padded h/c lanes stay exactly zero
# (their gate columns are zero => i=f=o=0.5, g=0, c stays 0, h stays 0).
# ---------------------------------------------------------------------------
def _lstm_proj_chunk_kernel(gx_ref, whh_ref, wout_ref, bout_ref, h0_ref, c0_ref,
                            logits_ref, hT_ref, cT_ref,
                            h_scr, c_scr, *, tc, hp, unroll):
    @pl.when(pl.program_id(0) == 0)
    def _():
        h_scr[...] = h0_ref[...]
        c_scr[...] = c0_ref[...]

    whh = whh_ref[...]                                  # (Hp, 4Hp) bf16, resident
    wout = wout_ref[...]                                # (Hp, C)   bf16, resident
    # Hoist the bias broadcast out of the loop (JAX does not CSE broadcasts).
    bout = jnp.broadcast_to(bout_ref[...],
                            (h0_ref.shape[0], bout_ref.shape[-1]))  # (B, C) f32

    def step(t, carry):
        h, c = carry                                    # (B, Hp) f32
        gates = (jnp.dot(h.astype(jnp.bfloat16), whh,
                         preferred_element_type=jnp.float32)
                 + gx_ref[t].astype(jnp.float32))       # (B, 4Hp) f32
        sig = jax.nn.sigmoid(gates[:, :3 * hp])         # one wide EUP pass
        g_g = jnp.tanh(gates[:, 3 * hp:])               # one wide EUP pass
        i_g = sig[:, 0 * hp:1 * hp]
        f_g = sig[:, 1 * hp:2 * hp]
        o_g = sig[:, 2 * hp:3 * hp]
        c_new = f_g * c + i_g * g_g
        h_new = o_g * jnp.tanh(c_new)
        logits_ref[t] = (jnp.dot(h_new.astype(jnp.bfloat16), wout,
                                 preferred_element_type=jnp.float32)
                         + bout).astype(logits_ref.dtype)
        return h_new, c_new

    h_fin, c_fin = lax.fori_loop(0, tc, step, (h_scr[...], c_scr[...]),
                                 unroll=unroll)

    h_scr[...] = h_fin
    c_scr[...] = c_fin
    # Constant-index output blocks: only flushed to HBM once, at the end.
    hT_ref[...] = h_fin
    cT_ref[...] = c_fin


def lstm_proj_sequence(gates_x, w_hh, w_out, b_out, h0, c0):
    """Fused LSTM recurrence + output projection.

    gates_x : (T, B, 4Hp) bf16  precomputed x@W_ih + b, gate order [i,f,o|g]
    w_hh    : (Hp, 4Hp)  bf16   gate order [i,f,o|g]
    w_out   : (Hp, C)    bf16
    b_out   : (1, C)     f32
    h0, c0  : (B, Hp)    f32
    returns : logits (T, B, C) f32, final h (B, Hp) f32, final c (B, Hp) f32
    """
    T, B, G = gates_x.shape
    Hp = h0.shape[-1]
    C = w_out.shape[-1]
    assert G == 4 * Hp and Hp % 128 == 0

    tc = 1
    for cand in (16, 8, 4, 2, 1):        # time-chunk that divides T
        if T % cand == 0:
            tc = cand
            break
    unroll = tc if tc <= 8 else 8        # cap unroll: keep vreg live ranges sane

    kernel = functools.partial(_lstm_proj_chunk_kernel, tc=tc, hp=Hp,
                               unroll=unroll)
    out_shapes = (
        jax.ShapeDtypeStruct((T, B, C), jnp.float32),   # logits
        jax.ShapeDtypeStruct((B, Hp), jnp.float32),     # final h
        jax.ShapeDtypeStruct((B, Hp), jnp.float32),     # final c
    )
    grid_spec = pltpu.PrefetchScalarGridSpec(
        num_scalar_prefetch=0,
        grid=(T // tc,),
        in_specs=[
            pl.BlockSpec((tc, B, 4 * Hp), lambda i: (i, 0, 0)),  # gates_x chunk
            pl.BlockSpec((Hp, 4 * Hp), lambda i: (0, 0)),        # W_hh (resident)
            pl.BlockSpec((Hp, C), lambda i: (0, 0)),             # W_out (resident)
            pl.BlockSpec((1, C), lambda i: (0, 0)),              # b_out
            pl.BlockSpec((B, Hp), lambda i: (0, 0)),             # h0
            pl.BlockSpec((B, Hp), lambda i: (0, 0)),             # c0
        ],
        out_specs=[
            pl.BlockSpec((tc, B, C), lambda i: (i, 0, 0)),       # logits chunk
            pl.BlockSpec((B, Hp), lambda i: (0, 0)),             # final h
            pl.BlockSpec((B, Hp), lambda i: (0, 0)),             # final c
        ],
        scratch_shapes=[
            pltpu.VMEM((B, Hp), jnp.float32),   # h carry across chunks
            pltpu.VMEM((B, Hp), jnp.float32),   # c carry across chunks
        ],
    )
    return pl.pallas_call(
        kernel,
        out_shape=out_shapes,
        grid_spec=grid_spec,
        compiler_params=pltpu.CompilerParams(
            dimension_semantics=("arbitrary",)),   # recurrence => sequential
    )(gates_x, w_hh, w_out, b_out, h0, c0)


# ---------------------------------------------------------------------------
# Parameter init (mimics xavier_uniform) + one-time inference param prep.
# ---------------------------------------------------------------------------
def xavier_uniform(key, shape):
    fan_in, fan_out = shape[0], shape[1]
    limit = jnp.sqrt(6.0 / (fan_in + fan_out))
    return jax.random.uniform(key, shape, jnp.float32, -limit, limit)


def init_params(key, num_chars, input_size, hidden_size):
    """Raw parameters, f32, gate order (i, f, g, o) like PyTorch LSTM.

    NOTE: PyTorch stores weights as (out, in); these are kept transposed.
    When loading pretrained weights: transpose, and sum b_ih + b_hh into "b".
    """
    k_emb, k_ih, k_hh, k_out = jax.random.split(key, 4)
    return {
        "char_embedding": xavier_uniform(k_emb, (num_chars, input_size)),
        "w_ih": xavier_uniform(k_ih, (input_size, 4 * hidden_size)),
        "w_hh": xavier_uniform(k_hh, (hidden_size, 4 * hidden_size)),
        "b": jnp.zeros((1, 4 * hidden_size), jnp.float32),
        "w_out": xavier_uniform(k_out, (hidden_size, num_chars)),
        "b_out": jnp.zeros((1, num_chars), jnp.float32),
    }


def _reorder_pad_gate_cols(w, h, hp):
    """(..., 4H) in (i,f,g,o) order -> (..., 4Hp) in (i,f,o,g) order, per-gate
    zero padding so every gate starts at a multiple of Hp (lane-aligned)."""
    i_g, f_g, g_g, o_g = jnp.split(w, 4, axis=-1)
    pad = [(0, 0)] * (w.ndim - 1) + [(0, hp - h)]
    return jnp.concatenate([jnp.pad(x, pad) for x in (i_g, f_g, o_g, g_g)],
                           axis=-1)


def prepare_params(raw, hidden_size):
    """One-time inference param prep (run OUTSIDE the per-step forward):
      * fold the input projection into the embedding: ih_table = E @ W_ih + b
        (legal because dropout is identity in eval mode)
      * reorder gates to [i, f, o | g] and pad each gate to Hp = ceil(H/128)*128
      * cast all matmul operands to bf16 once (not per forward call)
    """
    H = hidden_size
    Hp = _round_up(H, 128)

    ih_table = raw["char_embedding"] @ raw["w_ih"] + raw["b"]   # (num_chars, 4H)
    ih_table = _reorder_pad_gate_cols(ih_table, H, Hp)          # (num_chars, 4Hp)

    w_hh = jnp.pad(raw["w_hh"], ((0, Hp - H), (0, 0)))          # pad input rows
    w_hh = _reorder_pad_gate_cols(w_hh, H, Hp)                  # (Hp, 4Hp)

    w_out = jnp.pad(raw["w_out"], ((0, Hp - H), (0, 0)))        # (Hp, C)

    return {
        "ih_table": ih_table.astype(jnp.bfloat16),
        "w_hh": w_hh.astype(jnp.bfloat16),
        "w_out": w_out.astype(jnp.bfloat16),
        "b_out": raw["b_out"].astype(jnp.float32),
    }


# ---------------------------------------------------------------------------
# Full forward pass of PTBModel (rnn_type='lstm', eval mode)
# ---------------------------------------------------------------------------
def ptb_model_forward(params, inputs, state):
    """inputs: (T, B) int32 ids; state: (h0, c0) each (B, H) f32.
    Returns (logits, (hT, cT), None), matching PTBModel.forward (lstm branch;
    dropout == identity in eval mode)."""
    h0, c0 = state
    H = h0.shape[-1]
    Hp = params["w_hh"].shape[0]

    # Folded embedding + input projection + bias: one gather, bf16 stream.
    gates_x = jnp.take(params["ih_table"], inputs, axis=0)       # (T, B, 4Hp) bf16

    if Hp != H:
        # Padded lanes stay exactly zero through the recurrence (see kernel doc),
        # so slicing the final state back to H below is exact.
        h0 = jnp.pad(h0, ((0, 0), (0, Hp - H)))
        c0 = jnp.pad(c0, ((0, 0), (0, Hp - H)))

    logits, hT, cT = lstm_proj_sequence(gates_x, params["w_hh"],
                                        params["w_out"], params["b_out"],
                                        h0, c0)
    return logits, (hT[:, :H], cT[:, :H]), None


# ---------------------------------------------------------------------------
# Pure-JAX reference (f32, unpadded, PyTorch gate order) for correctness.
# ---------------------------------------------------------------------------
def ptb_model_forward_ref(raw, inputs, state):
    h, c = state
    H = h.shape[-1]
    emb = jnp.take(raw["char_embedding"], inputs, axis=0)

    def step(carry, x_t):
        h, c = carry
        gates = x_t @ raw["w_ih"] + raw["b"] + h @ raw["w_hh"]
        i_g = jax.nn.sigmoid(gates[:, 0 * H:1 * H])
        f_g = jax.nn.sigmoid(gates[:, 1 * H:2 * H])
        g_g = jnp.tanh(gates[:, 2 * H:3 * H])
        o_g = jax.nn.sigmoid(gates[:, 3 * H:4 * H])
        c_new = f_g * c + i_g * g_g
        h_new = o_g * jnp.tanh(c_new)
        return (h_new, c_new), h_new

    (hT, cT), outs = lax.scan(step, (h, c), emb)
    logits = outs @ raw["w_out"] + raw["b_out"]
    return logits, (hT, cT)


# ---------------------------------------------------------------------------
if __name__ == "__main__":
    # small shapes consistent with the module
    T, B = 8, 8                 # seq length, batch
    NUM_CHARS = 50
    INPUT_SIZE = 32
    HIDDEN_SIZE = 32

    key = jax.random.PRNGKey(0)
    k_p, k_x, k_h, k_c = jax.random.split(key, 4)

    raw_params = init_params(k_p, NUM_CHARS, INPUT_SIZE, HIDDEN_SIZE)
    params = prepare_params(raw_params, HIDDEN_SIZE)   # folded / padded / bf16
    inputs = jax.random.randint(k_x, (T, B), 0, NUM_CHARS, dtype=jnp.int32)
    h0 = jax.random.normal(k_h, (B, HIDDEN_SIZE), jnp.float32) * 0.1
    c0 = jax.random.normal(k_c, (B, HIDDEN_SIZE), jnp.float32) * 0.1

    fwd = jax.jit(ptb_model_forward)
    logits, (hT, cT), hyper_state = fwd(params, inputs, (h0, c0))
    jax.block_until_ready((logits, hT, cT))

    assert logits.shape == (T, B, NUM_CHARS)
    assert hT.shape == (B, HIDDEN_SIZE) and cT.shape == (B, HIDDEN_SIZE)
    assert hyper_state is None
    assert bool(jnp.all(jnp.isfinite(logits)))

    # Correctness vs. pure-JAX f32 reference (bf16 MXU operands => loose tol).
    logits_ref, (hT_ref, cT_ref) = ptb_model_forward_ref(raw_params, inputs,
                                                         (h0, c0))
    assert bool(jnp.allclose(logits, logits_ref, atol=5e-2, rtol=5e-2))
    assert bool(jnp.allclose(hT, hT_ref, atol=5e-2, rtol=5e-2))
    assert bool(jnp.allclose(cT, cT_ref, atol=5e-2, rtol=5e-2))

    print("KERNEL_OK")
</pallas_src>

<mosaic_0001>
module attributes {stable_mosaic.version = 11 : i64} {
  func.func @_lstm_proj_chunk_kernel(%arg0: i32, %arg1: memref<8x8x512xbf16, #tpu.memory_space<vmem>>, %arg2: memref<128x512xbf16, #tpu.memory_space<vmem>>, %arg3: memref<128x50xbf16, #tpu.memory_space<vmem>>, %arg4: memref<1x50xf32, #tpu.memory_space<vmem>>, %arg5: memref<8x128xf32, #tpu.memory_space<vmem>>, %arg6: memref<8x128xf32, #tpu.memory_space<vmem>>, %arg7: memref<8x8x50xf32, #tpu.memory_space<vmem>>, %arg8: memref<8x128xf32, #tpu.memory_space<vmem>>, %arg9: memref<8x128xf32, #tpu.memory_space<vmem>>, %arg10: memref<8x128xf32, #tpu.memory_space<vmem>>, %arg11: memref<8x128xf32, #tpu.memory_space<vmem>>) attributes {dimension_semantics = [#tpu.dimension_semantics<arbitrary>], iteration_bounds = array<i64: 1>, scalar_prefetch = 0 : i64, scratch_operands = 2 : i64, tpu.core_type = #tpu.core_type<tc>, window_params = [{transform_indices = @transform_0, window_bounds = array<i64: 8, 8, 512>}, {pipeline_mode = #tpu.pipeline_mode<synchronous>, transform_indices = @transform_1, window_bounds = array<i64: 128, 512>}, {pipeline_mode = #tpu.pipeline_mode<synchronous>, transform_indices = @transform_2, window_bounds = array<i64: 128, 50>}, {pipeline_mode = #tpu.pipeline_mode<synchronous>, transform_indices = @transform_3, window_bounds = array<i64: 1, 50>}, {pipeline_mode = #tpu.pipeline_mode<synchronous>, transform_indices = @transform_4, window_bounds = array<i64: 8, 128>}, {pipeline_mode = #tpu.pipeline_mode<synchronous>, transform_indices = @transform_5, window_bounds = array<i64: 8, 128>}, {transform_indices = @transform_6, window_bounds = array<i64: 8, 8, 50>}, {pipeline_mode = #tpu.pipeline_mode<synchronous>, transform_indices = @transform_7, window_bounds = array<i64: 8, 128>}, {pipeline_mode = #tpu.pipeline_mode<synchronous>, transform_indices = @transform_8, window_bounds = array<i64: 8, 128>}]} {
    %c0_i32 = arith.constant 0 : i32
    %0 = arith.cmpi eq, %arg0, %c0_i32 : i32
    %1 = arith.extui %0 : i1 to i32
    %c0_i32_0 = arith.constant 0 : i32
    %2 = arith.cmpi ne, %1, %c0_i32_0 : i32
    scf.if %2 {
      %c0_74 = arith.constant 0 : index
      %c0_75 = arith.constant 0 : index
      %254 = vector.load %arg5[%c0_74, %c0_75] : memref<8x128xf32, #tpu.memory_space<vmem>>, vector<8x128xf32>
      %c0_76 = arith.constant 0 : index
      %c0_77 = arith.constant 0 : index
      %255 = vector.load %arg10[%c0_76, %c0_77] : memref<8x128xf32, #tpu.memory_space<vmem>>, vector<8x128xf32>
      tpu.vector_store %arg10[%c0_76, %c0_77], %254 {strides = array<i32>} : memref<8x128xf32, #tpu.memory_space<vmem>>, vector<8x128xf32>,
      %c0_78 = arith.constant 0 : index
      %c0_79 = arith.constant 0 : index
      %256 = vector.load %arg6[%c0_78, %c0_79] : memref<8x128xf32, #tpu.memory_space<vmem>>, vector<8x128xf32>
      %c0_80 = arith.constant 0 : index
      %c0_81 = arith.constant 0 : index
      %257 = vector.load %arg11[%c0_80, %c0_81] : memref<8x128xf32, #tpu.memory_space<vmem>>, vector<8x128xf32>
      tpu.vector_store %arg11[%c0_80, %c0_81], %256 {strides = array<i32>} : memref<8x128xf32, #tpu.memory_space<vmem>>, vector<8x128xf32>,
    } else {
    }
    %c0 = arith.constant 0 : index
    %c0_1 = arith.constant 0 : index
    %3 = vector.load %arg2[%c0, %c0_1] : memref<128x512xbf16, #tpu.memory_space<vmem>>, vector<128x512xbf16>
    %c0_2 = arith.constant 0 : index
    %c0_3 = arith.constant 0 : index
    %4 = vector.load %arg3[%c0_2, %c0_3] : memref<128x50xbf16, #tpu.memory_space<vmem>>, vector<128x50xbf16>
    %c0_4 = arith.constant 0 : index
    %c0_5 = arith.constant 0 : index
    %5 = vector.load %arg4[%c0_4, %c0_5] : memref<1x50xf32, #tpu.memory_space<vmem>>, vector<1x50xf32>
    %6 = vector.shape_cast %5 : vector<1x50xf32> to vector<1x50xf32>
    %7 = vector.broadcast %6 : vector<1x50xf32> to vector<8x50xf32>
    %c0_6 = arith.constant 0 : index
    %c0_7 = arith.constant 0 : index
    %8 = vector.load %arg10[%c0_6, %c0_7] : memref<8x128xf32, #tpu.memory_space<vmem>>, vector<8x128xf32>
    %c0_8 = arith.constant 0 : index
    %c0_9 = arith.constant 0 : index
    %9 = vector.load %arg11[%c0_8, %c0_9] : memref<8x128xf32, #tpu.memory_space<vmem>>, vector<8x128xf32>
    %c0_i32_10 = arith.constant 0 : i32
    %10 = arith.truncf %8 : vector<8x128xf32> to vector<8x128xbf16>
    %cst = arith.constant dense<0.000000e+00> : vector<8x512xf32>
    %11 = tpu.matmul %10, %3, %cst {dimension_numbers = #tpu.dot_dimension_numbers<[1], [0], [0], [1], [0, 0, 1, 1], [], []>} : vector<8x128xbf16>, vector<128x512xbf16>, vector<8x512xf32> -> vector<8x512xf32>
    %12 = arith.index_cast %c0_i32_10 : i32 to index
    %c0_11 = arith.constant 0 : index
    %c0_12 = arith.constant 0 : index
    %13 = vector.load %arg1[%12, %c0_11, %c0_12] : memref<8x8x512xbf16, #tpu.memory_space<vmem>>, vector<1x8x512xbf16>
    %14 = vector.shape_cast %13 : vector<1x8x512xbf16> to vector<8x512xbf16>
    %15 = arith.extf %14 : vector<8x512xbf16> to vector<8x512xf32>
    %16 = arith.addf %11, %15 : vector<8x512xf32>
    %17 = vector.extract_strided_slice %16 {offsets = [0, 0], sizes = [8, 384], strides = [1, 1]} : vector<8x512xf32> to vector<8x384xf32>
    %18 = arith.negf %17 : vector<8x384xf32>
    %19 = math.exp %18 : vector<8x384xf32>
    %cst_13 = arith.constant 1.000000e+00 : f32
    %20 = vector.broadcast %cst_13 : f32 to vector<8x384xf32>
    %21 = arith.addf %20, %19 : vector<8x384xf32>
    %22 = arith.divf %20, %21 : vector<8x384xf32>
    %23 = vector.extract_strided_slice %16 {offsets = [0, 384], sizes = [8, 128], strides = [1, 1]} : vector<8x512xf32> to vector<8x128xf32>
    %24 = math.tanh %23 : vector<8x128xf32>
    %25 = vector.extract_strided_slice %22 {offsets = [0, 0], sizes = [8, 128], strides = [1, 1]} : vector<8x384xf32> to vector<8x128xf32>
    %26 = vector.extract_strided_slice %22 {offsets = [0, 128], sizes = [8, 128], strides = [1, 1]} : vector<8x384xf32> to vector<8x128xf32>
    %27 = vector.extract_strided_slice %22 {offsets = [0, 256], sizes = [8, 128], strides = [1, 1]} : vector<8x384xf32> to vector<8x128xf32>
    %28 = arith.mulf %26, %9 : vector<8x128xf32>
    %29 = arith.mulf %25, %24 : vector<8x128xf32>
    %30 = arith.addf %28, %29 : vector<8x128xf32>
    %31 = math.tanh %30 : vector<8x128xf32>
    %32 = arith.mulf %27, %31 : vector<8x128xf32>
    %33 = arith.truncf %32 : vector<8x128xf32> to vector<8x128xbf16>
    %cst_14 = arith.constant dense<0.000000e+00> : vector<8x50xf32>
    %34 = tpu.matmul %33, %4, %cst_14 {dimension_numbers = #tpu.dot_dimension_numbers<[1], [0], [0], [1], [0, 0, 1, 1], [], []>} : vector<8x128xbf16>, vector<128x50xbf16>, vector<8x50xf32> -> vector<8x50xf32>
    %35 = arith.addf %34, %7 : vector<8x50xf32>
    %36 = arith.index_cast %c0_i32_10 : i32 to index
    %c0_15 = arith.constant 0 : index
    %c0_16 = arith.constant 0 : index
    %37 = vector.load %arg7[%36, %c0_15, %c0_16] : memref<8x8x50xf32, #tpu.memory_space<vmem>>, vector<1x8x50xf32>
    %38 = vector.shape_cast %37 : vector<1x8x50xf32> to vector<8x50xf32>
    %39 = vector.shape_cast %35 : vector<8x50xf32> to vector<1x8x50xf32>
    tpu.vector_store %arg7[%36, %c0_15, %c0_16], %39 {strides = array<i32>} : memref<8x8x50xf32, #tpu.memory_space<vmem>>, vector<1x8x50xf32>,
    %c1_i32 = arith.constant 1 : i32
    %40 = arith.truncf %32 : vector<8x128xf32> to vector<8x128xbf16>
    %cst_17 = arith.constant dense<0.000000e+00> : vector<8x512xf32>
    %41 = tpu.matmul %40, %3, %cst_17 {dimension_numbers = #tpu.dot_dimension_numbers<[1], [0], [0], [1], [0, 0, 1, 1], [], []>} : vector<8x128xbf16>, vector<128x512xbf16>, vector<8x512xf32> -> vector<8x512xf32>
    %42 = arith.index_cast %c1_i32 : i32 to index
    %c0_18 = arith.constant 0 : index
    %c0_19 = arith.constant 0 : index
    %43 = vector.load %arg1[%42, %c0_18, %c0_19] : memref<8x8x512xbf16, #tpu.memory_space<vmem>>, vector<1x8x512xbf16>
    %44 = vector.shape_cast %43 : vector<1x8x512xbf16> to vector<8x512xbf16>
    %45 = arith.extf %44 : vector<8x512xbf16> to vector<8x512xf32>
    %46 = arith.addf %41, %45 : vector<8x512xf32>
    %47 = vector.extract_strided_slice %46 {offsets = [0, 0], sizes = [8, 384], strides = [1, 1]} : vector<8x512xf32> to vector<8x384xf32>
    %48 = arith.negf %47 : vector<8x384xf32>
    %49 = math.exp %48 : vector<8x384xf32>
    %cst_20 = arith.constant 1.000000e+00 : f32
    %50 = vector.broadcast %cst_20 : f32 to vector<8x384xf32>
    %51 = arith.addf %50, %49 : vector<8x384xf32>
    %52 = arith.divf %50, %51 : vector<8x384xf32>
    %53 = vector.extract_strided_slice %46 {offsets = [0, 384], sizes = [8, 128], strides = [1, 1]} : vector<8x512xf32> to vector<8x128xf32>
    %54 = math.tanh %53 : vector<8x128xf32>
    %55 = vector.extract_strided_slice %52 {offsets = [0, 0], sizes = [8, 128], strides = [1, 1]} : vector<8x384xf32> to vector<8x128xf32>
    %56 = vector.extract_strided_slice %52 {offsets = [0, 128], sizes = [8, 128], strides = [1, 1]} : vector<8x384xf32> to vector<8x128xf32>
    %57 = vector.extract_strided_slice %52 {offsets = [0, 256], sizes = [8, 128], strides = [1, 1]} : vector<8x384xf32> to vector<8x128xf32>
    %58 = arith.mulf %56, %30 : vector<8x128xf32>
    %59 = arith.mulf %55, %54 : vector<8x128xf32>
    %60 = arith.addf %58, %59 : vector<8x128xf32>
    %61 = math.tanh %60 : vector<8x128xf32>
    %62 = arith.mulf %57, %61 : vector<8x128xf32>
    %63 = arith.truncf %62 : vector<8x128xf32> to vector<8x128xbf16>
    %cst_21 = arith.constant dense<0.000000e+00> : vector<8x50xf32>
    %64 = tpu.matmul %63, %4, %cst_21 {dimension_numbers = #tpu.dot_dimension_numbers<[1], [0], [0], [1], [0, 0, 1, 1], [], []>} : vector<8x128xbf16>, vector<128x50xbf16>, vector<8x50xf32> -> vector<8x50xf32>
    %65 = arith.addf %64, %7 : vector<8x50xf32>
    %66 = arith.index_cast %c1_i32 : i32 to index
    %c0_22 = arith.constant 0 : index
    %c0_23 = arith.constant 0 : index
    %67 = vector.load %arg7[%66, %c0_22, %c0_23] : memref<8x8x50xf32, #tpu.memory_space<vmem>>, vector<1x8x50xf32>
    %68 = vector.shape_cast %67 : vector<1x8x50xf32> to vector<8x50xf32>
    %69 = vector.shape_cast %65 : vector<8x50xf32> to vector<1x8x50xf32>
    tpu.vector_store %arg7[%66, %c0_22, %c0_23], %69 {strides = array<i32>} : memref<8x8x50xf32, #tpu.memory_space<vmem>>, vector<1x8x50xf32>,
    %c2_i32 = arith.constant 2 : i32
    %70 = arith.truncf %62 : vector<8x128xf32> to vector<8x128xbf16>
    %cst_24 = arith.constant dense<0.000000e+00> : vector<8x512xf32>
    %71 = tpu.matmul %70, %3, %cst_24 {dimension_numbers = #tpu.dot_dimension_numbers<[1], [0], [0], [1], [0, 0, 1, 1], [], []>} : vector<8x128xbf16>, vector<128x512xbf16>, vector<8x512xf32> -> vector<8x512xf32>
    %72 = arith.index_cast %c2_i32 : i32 to index
    %c0_25 = arith.constant 0 : index
    %c0_26 = arith.constant 0 : index
    %73 = vector.load %arg1[%72, %c0_25, %c0_26] : memref<8x8x512xbf16, #tpu.memory_space<vmem>>, vector<1x8x512xbf16>
    %74 = vector.shape_cast %73 : vector<1x8x512xbf16> to vector<8x512xbf16>
    %75 = arith.extf %74 : vector<8x512xbf16> to vector<8x512xf32>
    %76 = arith.addf %71, %75 : vector<8x512xf32>
    %77 = vector.extract_strided_slice %76 {offsets = [0, 0], sizes = [8, 384], strides = [1, 1]} : vector<8x512xf32> to vector<8x384xf32>
    %78 = arith.negf %77 : vector<8x384xf32>
    %79 = math.exp %78 : vector<8x384xf32>
    %cst_27 = arith.constant 1.000000e+00 : f32
    %80 = vector.broadcast %cst_27 : f32 to vector<8x384xf32>
    %81 = arith.addf %80, %79 : vector<8x384xf32>
    %82 = arith.divf %80, %81 : vector<8x384xf32>
    %83 = vector.extract_strided_slice %76 {offsets = [0, 384], sizes = [8, 128], strides = [1, 1]} : vector<8x512xf32> to vector<8x128xf32>
    %84 = math.tanh %83 : vector<8x128xf32>
    %85 = vector.extract_strided_slice %82 {offsets = [0, 0], sizes = [8, 128], strides = [1, 1]} : vector<8x384xf32> to vector<8x128xf32>
    %86 = vector.extract_strided_slice %82 {offsets = [0, 128], sizes = [8, 128], strides = [1, 1]} : vector<8x384xf32> to vector<8x128xf32>
    %87 = vector.extract_strided_slice %82 {offsets = [0, 256], sizes = [8, 128], strides = [1, 1]} : vector<8x384xf32> to vector<8x128xf32>
    %88 = arith.mulf %86, %60 : vector<8x128xf32>
    %89 = arith.mulf %85, %84 : vector<8x128xf32>
    %90 = arith.addf %88, %89 : vector<8x128xf32>
    %91 = math.tanh %90 : vector<8x128xf32>
    %92 = arith.mulf %87, %91 : vector<8x128xf32>
    %93 = arith.truncf %92 : vector<8x128xf32> to vector<8x128xbf16>
    %cst_28 = arith.constant dense<0.000000e+00> : vector<8x50xf32>
    %94 = tpu.matmul %93, %4, %cst_28 {dimension_numbers = #tpu.dot_dimension_numbers<[1], [0], [0], [1], [0, 0, 1, 1], [], []>} : vector<8x128xbf16>, vector<128x50xbf16>, vector<8x50xf32> -> vector<8x50xf32>
    %95 = arith.addf %94, %7 : vector<8x50xf32>
    %96 = arith.index_cast %c2_i32 : i32 to index
    %c0_29 = arith.constant 0 : index
    %c0_30 = arith.constant 0 : index
    %97 = vector.load %arg7[%96, %c0_29, %c0_30] : memref<8x8x50xf32, #tpu.memory_space<vmem>>, vector<1x8x50xf32>
    %98 = vector.shape_cast %97 : vector<1x8x50xf32> to vector<8x50xf32>
    %99 = vector.shape_cast %95 : vector<8x50xf32> to vector<1x8x50xf32>
    tpu.vector_store %arg7[%96, %c0_29, %c0_30], %99 {strides = array<i32>} : memref<8x8x50xf32, #tpu.memory_space<vmem>>, vector<1x8x50xf32>,
    %c3_i32 = arith.constant 3 : i32
    %100 = arith.truncf %92 : vector<8x128xf32> to vector<8x128xbf16>
    %cst_31 = arith.constant dense<0.000000e+00> : vector<8x512xf32>
    %101 = tpu.matmul %100, %3, %cst_31 {dimension_numbers = #tpu.dot_dimension_numbers<[1], [0], [0], [1], [0, 0, 1, 1], [], []>} : vector<8x128xbf16>, vector<128x512xbf16>, vector<8x512xf32> -> vector<8x512xf32>
    %102 = arith.index_cast %c3_i32 : i32 to index
    %c0_32 = arith.constant 0 : index
    %c0_33 = arith.constant 0 : index
    %103 = vector.load %arg1[%102, %c0_32, %c0_33] : memref<8x8x512xbf16, #tpu.memory_space<vmem>>, vector<1x8x512xbf16>
    %104 = vector.shape_cast %103 : vector<1x8x512xbf16> to vector<8x512xbf16>
    %105 = arith.extf %104 : vector<8x512xbf16> to vector<8x512xf32>
    %106 = arith.addf %101, %105 : vector<8x512xf32>
    %107 = vector.extract_strided_slice %106 {offsets = [0, 0], sizes = [8, 384], strides = [1, 1]} : vector<8x512xf32> to vector<8x384xf32>
    %108 = arith.negf %107 : vector<8x384xf32>
    %109 = math.exp %108 : vector<8x384xf32>
    %cst_34 = arith.constant 1.000000e+00 : f32
    %110 = vector.broadcast %cst_34 : f32 to vector<8x384xf32>
    %111 = arith.addf %110, %109 : vector<8x384xf32>
    %112 = arith.divf %110, %111 : vector<8x384xf32>
    %113 = vector.extract_strided_slice %106 {offsets = [0, 384], sizes = [8, 128], strides = [1, 1]} : vector<8x512xf32> to vector<8x128xf32>
    %114 = math.tanh %113 : vector<8x128xf32>
    %115 = vector.extract_strided_slice %112 {offsets = [0, 0], sizes = [8, 128], strides = [1, 1]} : vector<8x384xf32> to vector<8x128xf32>
    %116 = vector.extract_strided_slice %112 {offsets = [0, 128], sizes = [8, 128], strides = [1, 1]} : vector<8x384xf32> to vector<8x128xf32>
    %117 = vector.extract_strided_slice %112 {offsets = [0, 256], sizes = [8, 128], strides = [1, 1]} : vector<8x384xf32> to vector<8x128xf32>
    %118 = arith.mulf %116, %90 : vector<8x128xf32>
    %119 = arith.mulf %115, %114 : vector<8x128xf32>
    %120 = arith.addf %118, %119 : vector<8x128xf32>
    %121 = math.tanh %120 : vector<8x128xf32>
    %122 = arith.mulf %117, %121 : vector<8x128xf32>
    %123 = arith.truncf %122 : vector<8x128xf32> to vector<8x128xbf16>
    %cst_35 = arith.constant dense<0.000000e+00> : vector<8x50xf32>
    %124 = tpu.matmul %123, %4, %cst_35 {dimension_numbers = #tpu.dot_dimension_numbers<[1], [0], [0], [1], [0, 0, 1, 1], [], []>} : vector<8x128xbf16>, vector<128x50xbf16>, vector<8x50xf32> -> vector<8x50xf32>
    %125 = arith.addf %124, %7 : vector<8x50xf32>
    %126 = arith.index_cast %c3_i32 : i32 to index
    %c0_36 = arith.constant 0 : index
    %c0_37 = arith.constant 0 : index
    %127 = vector.load %arg7[%126, %c0_36, %c0_37] : memref<8x8x50xf32, #tpu.memory_space<vmem>>, vector<1x8x50xf32>
    %128 = vector.shape_cast %127 : vector<1x8x50xf32> to vector<8x50xf32>
    %129 = vector.shape_cast %125 : vector<8x50xf32> to vector<1x8x50xf32>
    tpu.vector_store %arg7[%126, %c0_36, %c0_37], %129 {strides = array<i32>} : memref<8x8x50xf32, #tpu.memory_space<vmem>>, vector<1x8x50xf32>,
    %c4_i32 = arith.constant 4 : i32
    %130 = arith.truncf %122 : vector<8x128xf32> to vector<8x128xbf16>
    %cst_38 = arith.constant dense<0.000000e+00> : vector<8x512xf32>
    %131 = tpu.matmul %130, %3, %cst_38 {dimension_numbers = #tpu.dot_dimension_numbers<[1], [0], [0], [1], [0, 0, 1, 1], [], []>} : vector<8x128xbf16>, vector<128x512xbf16>, vector<8x512xf32> -> vector<8x512xf32>
    %132 = arith.index_cast %c4_i32 : i32 to index
    %c0_39 = arith.constant 0 : index
    %c0_40 = arith.constant 0 : index
    %133 = vector.load %arg1[%132, %c0_39, %c0_40] : memref<8x8x512xbf16, #tpu.memory_space<vmem>>, vector<1x8x512xbf16>
    %134 = vector.shape_cast %133 : vector<1x8x512xbf16> to vector<8x512xbf16>
    %135 = arith.extf %134 : vector<8x512xbf16> to vector<8x512xf32>
    %136 = arith.addf %131, %135 : vector<8x512xf32>
    %137 = vector.extract_strided_slice %136 {offsets = [0, 0], sizes = [8, 384], strides = [1, 1]} : vector<8x512xf32> to vector<8x384xf32>
    %138 = arith.negf %137 : vector<8x384xf32>
    %139 = math.exp %138 : vector<8x384xf32>
    %cst_41 = arith.constant 1.000000e+00 : f32
    %140 = vector.broadcast %cst_41 : f32 to vector<8x384xf32>
    %141 = arith.addf %140, %139 : vector<8x384xf32>
    %142 = arith.divf %140, %141 : vector<8x384xf32>
    %143 = vector.extract_strided_slice %136 {offsets = [0, 384], sizes = [8, 128], strides = [1, 1]} : vector<8x512xf32> to vector<8x128xf32>
    %144 = math.tanh %143 : vector<8x128xf32>
    %145 = vector.extract_strided_slice %142 {offsets = [0, 0], sizes = [8, 128], strides = [1, 1]} : vector<8x384xf32> to vector<8x128xf32>
    %146 = vector.extract_strided_slice %142 {offsets = [0, 128], sizes = [8, 128], strides = [1, 1]} : vector<8x384xf32> to vector<8x128xf32>
    %147 = vector.extract_strided_slice %142 {offsets = [0, 256], sizes = [8, 128], strides = [1, 1]} : vector<8x384xf32> to vector<8x128xf32>
    %148 = arith.mulf %146, %120 : vector<8x128xf32>
    %149 = arith.mulf %145, %144 : vector<8x128xf32>
    %150 = arith.addf %148, %149 : vector<8x128xf32>
    %151 = math.tanh %150 : vector<8x128xf32>
    %152 = arith.mulf %147, %151 : vector<8x128xf32>
    %153 = arith.truncf %152 : vector<8x128xf32> to vector<8x128xbf16>
    %cst_42 = arith.constant dense<0.000000e+00> : vector<8x50xf32>
    %154 = tpu.matmul %153, %4, %cst_42 {dimension_numbers = #tpu.dot_dimension_numbers<[1], [0], [0], [1], [0, 0, 1, 1], [], []>} : vector<8x128xbf16>, vector<128x50xbf16>, vector<8x50xf32> -> vector<8x50xf32>
    %155 = arith.addf %154, %7 : vector<8x50xf32>
    %156 = arith.index_cast %c4_i32 : i32 to index
    %c0_43 = arith.constant 0 : index
    %c0_44 = arith.constant 0 : index
    %157 = vector.load %arg7[%156, %c0_43, %c0_44] : memref<8x8x50xf32, #tpu.memory_space<vmem>>, vector<1x8x50xf32>
    %158 = vector.shape_cast %157 : vector<1x8x50xf32> to vector<8x50xf32>
    %159 = vector.shape_cast %155 : vector<8x50xf32> to vector<1x8x50xf32>
    tpu.vector_store %arg7[%156, %c0_43, %c0_44], %159 {strides = array<i32>} : memref<8x8x50xf32, #tpu.memory_space<vmem>>, vector<1x8x50xf32>,
    %c5_i32 = arith.constant 5 : i32
    %160 = arith.truncf %152 : vector<8x128xf32> to vector<8x128xbf16>
    %cst_45 = arith.constant dense<0.000000e+00> : vector<8x512xf32>
    %161 = tpu.matmul %160, %3, %cst_45 {dimension_numbers = #tpu.dot_dimension_numbers<[1], [0], [0], [1], [0, 0, 1, 1], [], []>} : vector<8x128xbf16>, vector<128x512xbf16>, vector<8x512xf32> -> vector<8x512xf32>
    %162 = arith.index_cast %c5_i32 : i32 to index
    %c0_46 = arith.constant 0 : index
    %c0_47 = arith.constant 0 : index
    %163 = vector.load %arg1[%162, %c0_46, %c0_47] : memref<8x8x512xbf16, #tpu.memory_space<vmem>>, vector<1x8x512xbf16>
    %164 = vector.shape_cast %163 : vector<1x8x512xbf16> to vector<8x512xbf16>
    %165 = arith.extf %164 : vector<8x512xbf16> to vector<8x512xf32>
    %166 = arith.addf %161, %165 : vector<8x512xf32>
    %167 = vector.extract_strided_slice %166 {offsets = [0, 0], sizes = [8, 384], strides = [1, 1]} : vector<8x512xf32> to vector<8x384xf32>
    %168 = arith.negf %167 : vector<8x384xf32>
    %169 = math.exp %168 : vector<8x384xf32>
    %cst_48 = arith.constant 1.000000e+00 : f32
    %170 = vector.broadcast %cst_48 : f32 to vector<8x384xf32>
    %171 = arith.addf %170, %169 : vector<8x384xf32>
    %172 = arith.divf %170, %171 : vector<8x384xf32>
    %173 = vector.extract_strided_slice %166 {offsets = [0, 384], sizes = [8, 128], strides = [1, 1]} : vector<8x512xf32> to vector<8x128xf32>
    %174 = math.tanh %173 : vector<8x128xf32>
    %175 = vector.extract_strided_slice %172 {offsets = [0, 0], sizes = [8, 128], strides = [1, 1]} : vector<8x384xf32> to vector<8x128xf32>
    %176 = vector.extract_strided_slice %172 {offsets = [0, 128], sizes = [8, 128], strides = [1, 1]} : vector<8x384xf32> to vector<8x128xf32>
    %177 = vector.extract_strided_slice %172 {offsets = [0, 256], sizes = [8, 128], strides = [1, 1]} : vector<8x384xf32> to vector<8x128xf32>
    %178 = arith.mulf %176, %150 : vector<8x128xf32>
    %179 = arith.mulf %175, %174 : vector<8x128xf32>
    %180 = arith.addf %178, %179 : vector<8x128xf32>
    %181 = math.tanh %180 : vector<8x128xf32>
    %182 = arith.mulf %177, %181 : vector<8x128xf32>
    %183 = arith.truncf %182 : vector<8x128xf32> to vector<8x128xbf16>
    %cst_49 = arith.constant dense<0.000000e+00> : vector<8x50xf32>
    %184 = tpu.matmul %183, %4, %cst_49 {dimension_numbers = #tpu.dot_dimension_numbers<[1], [0], [0], [1], [0, 0, 1, 1], [], []>} : vector<8x128xbf16>, vector<128x50xbf16>, vector<8x50xf32> -> vector<8x50xf32>
    %185 = arith.addf %184, %7 : vector<8x50xf32>
    %186 = arith.index_cast %c5_i32 : i32 to index
    %c0_50 = arith.constant 0 : index
    %c0_51 = arith.constant 0 : index
    %187 = vector.load %arg7[%186, %c0_50, %c0_51] : memref<8x8x50xf32, #tpu.memory_space<vmem>>, vector<1x8x50xf32>
    %188 = vector.shape_cast %187 : vector<1x8x50xf32> to vector<8x50xf32>
    %189 = vector.shape_cast %185 : vector<8x50xf32> to vector<1x8x50xf32>
    tpu.vector_store %arg7[%186, %c0_50, %c0_51], %189 {strides = array<i32>} : memref<8x8x50xf32, #tpu.memory_space<vmem>>, vector<1x8x50xf32>,
    %c6_i32 = arith.constant 6 : i32
    %190 = arith.truncf %182 : vector<8x128xf32> to vector<8x128xbf16>
    %cst_52 = arith.constant dense<0.000000e+00> : vector<8x512xf32>
    %191 = tpu.matmul %190, %3, %cst_52 {dimension_numbers = #tpu.dot_dimension_numbers<[1], [0], [0], [1], [0, 0, 1, 1], [], []>} : vector<8x128xbf16>, vector<128x512xbf16>, vector<8x512xf32> -> vector<8x512xf32>
    %192 = arith.index_cast %c6_i32 : i32 to index
    %c0_53 = arith.constant 0 : index
    %c0_54 = arith.constant 0 : index
    %193 = vector.load %arg1[%192, %c0_53, %c0_54] : memref<8x8x512xbf16, #tpu.memory_space<vmem>>, vector<1x8x512xbf16>
    %194 = vector.shape_cast %193 : vector<1x8x512xbf16> to vector<8x512xbf16>
    %195 = arith.extf %194 : vector<8x512xbf16> to vector<8x512xf32>
    %196 = arith.addf %191, %195 : vector<8x512xf32>
    %197 = vector.extract_strided_slice %196 {offsets = [0, 0], sizes = [8, 384], strides = [1, 1]} : vector<8x512xf32> to vector<8x384xf32>
    %198 = arith.negf %197 : vector<8x384xf32>
    %199 = math.exp %198 : vector<8x384xf32>
    %cst_55 = arith.constant 1.000000e+00 : f32
    %200 = vector.broadcast %cst_55 : f32 to vector<8x384xf32>
    %201 = arith.addf %200, %199 : vector<8x384xf32>
    %202 = arith.divf %200, %201 : vector<8x384xf32>
    %203 = vector.extract_strided_slice %196 {offsets = [0, 384], sizes = [8, 128], strides = [1, 1]} : vector<8x512xf32> to vector<8x128xf32>
    %204 = math.tanh %203 : vector<8x128xf32>
    %205 = vector.extract_strided_slice %202 {offsets = [0, 0], sizes = [8, 128], strides = [1, 1]} : vector<8x384xf32> to vector<8x128xf32>
    %206 = vector.extract_strided_slice %202 {offsets = [0, 128], sizes = [8, 128], strides = [1, 1]} : vector<8x384xf32> to vector<8x128xf32>
    %207 = vector.extract_strided_slice %202 {offsets = [0, 256], sizes = [8, 128], strides = [1, 1]} : vector<8x384xf32> to vector<8x128xf32>
    %208 = arith.mulf %206, %180 : vector<8x128xf32>
    %209 = arith.mulf %205, %204 : vector<8x128xf32>
    %210 = arith.addf %208, %209 : vector<8x128xf32>
    %211 = math.tanh %210 : vector<8x128xf32>
    %212 = arith.mulf %207, %211 : vector<8x128xf32>
    %213 = arith.truncf %212 : vector<8x128xf32> to vector<8x128xbf16>
    %cst_56 = arith.constant dense<0.000000e+00> : vector<8x50xf32>
    %214 = tpu.matmul %213, %4, %cst_56 {dimension_numbers = #tpu.dot_dimension_numbers<[1], [0], [0], [1], [0, 0, 1, 1], [], []>} : vector<8x128xbf16>, vector<128x50xbf16>, vector<8x50xf32> -> vector<8x50xf32>
    %215 = arith.addf %214, %7 : vector<8x50xf32>
    %216 = arith.index_cast %c6_i32 : i32 to index
    %c0_57 = arith.constant 0 : index
    %c0_58 = arith.constant 0 : index
    %217 = vector.load %arg7[%216, %c0_57, %c0_58] : memref<8x8x50xf32, #tpu.memory_space<vmem>>, vector<1x8x50xf32>
    %218 = vector.shape_cast %217 : vector<1x8x50xf32> to vector<8x50xf32>
    %219 = vector.shape_cast %215 : vector<8x50xf32> to vector<1x8x50xf32>
    tpu.vector_store %arg7[%216, %c0_57, %c0_58], %219 {strides = array<i32>} : memref<8x8x50xf32, #tpu.memory_space<vmem>>, vector<1x8x50xf32>,
    %c7_i32 = arith.constant 7 : i32
    %220 = arith.truncf %212 : vector<8x128xf32> to vector<8x128xbf16>
    %cst_59 = arith.constant dense<0.000000e+00> : vector<8x512xf32>
    %221 = tpu.matmul %220, %3, %cst_59 {dimension_numbers = #tpu.dot_dimension_numbers<[1], [0], [0], [1], [0, 0, 1, 1], [], []>} : vector<8x128xbf16>, vector<128x512xbf16>, vector<8x512xf32> -> vector<8x512xf32>
    %222 = arith.index_cast %c7_i32 : i32 to index
    %c0_60 = arith.constant 0 : index
    %c0_61 = arith.constant 0 : index
    %223 = vector.load %arg1[%222, %c0_60, %c0_61] : memref<8x8x512xbf16, #tpu.memory_space<vmem>>, vector<1x8x512xbf16>
    %224 = vector.shape_cast %223 : vector<1x8x512xbf16> to vector<8x512xbf16>
    %225 = arith.extf %224 : vector<8x512xbf16> to vector<8x512xf32>
    %226 = arith.addf %221, %225 : vector<8x512xf32>
    %227 = vector.extract_strided_slice %226 {offsets = [0, 0], sizes = [8, 384], strides = [1, 1]} : vector<8x512xf32> to vector<8x384xf32>
    %228 = arith.negf %227 : vector<8x384xf32>
    %229 = math.exp %228 : vector<8x384xf32>
    %cst_62 = arith.constant 1.000000e+00 : f32
    %230 = vector.broadcast %cst_62 : f32 to vector<8x384xf32>
    %231 = arith.addf %230, %229 : vector<8x384xf32>
    %232 = arith.divf %230, %231 : vector<8x384xf32>
    %233 = vector.extract_strided_slice %226 {offsets = [0, 384], sizes = [8, 128], strides = [1, 1]} : vector<8x512xf32> to vector<8x128xf32>
    %234 = math.tanh %233 : vector<8x128xf32>
    %235 = vector.extract_strided_slice %232 {offsets = [0, 0], sizes = [8, 128], strides = [1, 1]} : vector<8x384xf32> to vector<8x128xf32>
    %236 = vector.extract_strided_slice %232 {offsets = [0, 128], sizes = [8, 128], strides = [1, 1]} : vector<8x384xf32> to vector<8x128xf32>
    %237 = vector.extract_strided_slice %232 {offsets = [0, 256], sizes = [8, 128], strides = [1, 1]} : vector<8x384xf32> to vector<8x128xf32>
    %238 = arith.mulf %236, %210 : vector<8x128xf32>
    %239 = arith.mulf %235, %234 : vector<8x128xf32>
    %240 = arith.addf %238, %239 : vector<8x128xf32>
    %241 = math.tanh %240 : vector<8x128xf32>
    %242 = arith.mulf %237, %241 : vector<8x128xf32>
    %243 = arith.truncf %242 : vector<8x128xf32> to vector<8x128xbf16>
    %cst_63 = arith.constant dense<0.000000e+00> : vector<8x50xf32>
    %244 = tpu.matmul %243, %4, %cst_63 {dimension_numbers = #tpu.dot_dimension_numbers<[1], [0], [0], [1], [0, 0, 1, 1], [], []>} : vector<8x128xbf16>, vector<128x50xbf16>, vector<8x50xf32> -> vector<8x50xf32>
    %245 = arith.addf %244, %7 : vector<8x50xf32>
    %246 = arith.index_cast %c7_i32 : i32 to index
    %c0_64 = arith.constant 0 : index
    %c0_65 = arith.constant 0 : index
    %247 = vector.load %arg7[%246, %c0_64, %c0_65] : memref<8x8x50xf32, #tpu.memory_space<vmem>>, vector<1x8x50xf32>
    %248 = vector.shape_cast %247 : vector<1x8x50xf32> to vector<8x50xf32>
    %249 = vector.shape_cast %245 : vector<8x50xf32> to vector<1x8x50xf32>
    tpu.vector_store %arg7[%246, %c0_64, %c0_65], %249 {strides = array<i32>} : memref<8x8x50xf32, #tpu.memory_space<vmem>>, vector<1x8x50xf32>,
    %c8_i32 = arith.constant 8 : i32
    %c0_66 = arith.constant 0 : index
    %c0_67 = arith.constant 0 : index
    %250 = vector.load %arg10[%c0_66, %c0_67] : memref<8x128xf32, #tpu.memory_space<vmem>>, vector<8x128xf32>
    tpu.vector_store %arg10[%c0_66, %c0_67], %242 {strides = array<i32>} : memref<8x128xf32, #tpu.memory_space<vmem>>, vector<8x128xf32>,
    %c0_68 = arith.constant 0 : index
    %c0_69 = arith.constant 0 : index
    %251 = vector.load %arg11[%c0_68, %c0_69] : memref<8x128xf32, #tpu.memory_space<vmem>>, vector<8x128xf32>
    tpu.vector_store %arg11[%c0_68, %c0_69], %240 {strides = array<i32>} : memref<8x128xf32, #tpu.memory_space<vmem>>, vector<8x128xf32>,
    %c0_70 = arith.constant 0 : index
    %c0_71 = arith.constant 0 : index
    %252 = vector.load %arg8[%c0_70, %c0_71] : memref<8x128xf32, #tpu.memory_space<vmem>>, vector<8x128xf32>
    tpu.vector_store %arg8[%c0_70, %c0_71], %242 {strides = array<i32>} : memref<8x128xf32, #tpu.memory_space<vmem>>, vector<8x128xf32>,
    %c0_72 = arith.constant 0 : index
    %c0_73 = arith.constant 0 : index
    %253 = vector.load %arg9[%c0_72, %c0_73] : memref<8x128xf32, #tpu.memory_space<vmem>>, vector<8x128xf32>
    tpu.vector_store %arg9[%c0_72, %c0_73], %240 {strides = array<i32>} : memref<8x128xf32, #tpu.memory_space<vmem>>, vector<8x128xf32>,
    return
  }
  func.func @transform_0(%arg0: i32) -> (i32, i32, i32) {
    %c0_i32 = arith.constant 0 : i32
    %c0_i32_0 = arith.constant 0 : i32
    %c0_i32_1 = arith.constant 0 : i32
    return %arg0, %c0_i32, %c0_i32_0 : i32, i32, i32
  }
  func.func @transform_1(%arg0: i32) -> (i32, i32) {
    %c0_i32 = arith.constant 0 : i32
    %c0_i32_0 = arith.constant 0 : i32
    %c0_i32_1 = arith.constant 0 : i32
    return %c0_i32, %c0_i32_0 : i32, i32
  }
  func.func @transform_2(%arg0: i32) -> (i32, i32) {
    %c0_i32 = arith.constant 0 : i32
    %c0_i32_0 = arith.constant 0 : i32
    %c0_i32_1 = arith.constant 0 : i32
    return %c0_i32, %c0_i32_0 : i32, i32
  }
  func.func @transform_3(%arg0: i32) -> (i32, i32) {
    %c0_i32 = arith.constant 0 : i32
    %c0_i32_0 = arith.constant 0 : i32
    %c0_i32_1 = arith.constant 0 : i32
    return %c0_i32, %c0_i32_0 : i32, i32
  }
  func.func @transform_4(%arg0: i32) -> (i32, i32) {
    %c0_i32 = arith.constant 0 : i32
    %c0_i32_0 = arith.constant 0 : i32
    %c0_i32_1 = arith.constant 0 : i32
    return %c0_i32, %c0_i32_0 : i32, i32
  }
  func.func @transform_5(%arg0: i32) -> (i32, i32) {
    %c0_i32 = arith.constant 0 : i32
    %c0_i32_0 = arith.constant 0 : i32
    %c0_i32_1 = arith.constant 0 : i32
    return %c0_i32, %c0_i32_0 : i32, i32
  }
  func.func @transform_6(%arg0: i32) -> (i32, i32, i32) {
    %c0_i32 = arith.constant 0 : i32
    %c0_i32_0 = arith.constant 0 : i32
    %c0_i32_1 = arith.constant 0 : i32
    return %arg0, %c0_i32, %c0_i32_0 : i32, i32, i32
  }
  func.func @transform_7(%arg0: i32) -> (i32, i32) {
    %c0_i32 = arith.constant 0 : i32
    %c0_i32_0 = arith.constant 0 : i32
    %c0_i32_1 = arith.constant 0 : i32
    return %c0_i32, %c0_i32_0 : i32, i32
  }
  func.func @transform_8(%arg0: i32) -> (i32, i32) {
    %c0_i32 = arith.constant 0 : i32
    %c0_i32_0 = arith.constant 0 : i32
    %c0_i32_1 = arith.constant 0 : i32
    return %c0_i32, %c0_i32_0 : i32, i32
  }
}

</mosaic_0001>

<llo_original>
// kernel: ptb_model_forward.1
$region0: #{ptb_model_forward.1}
  #allocation0 [shape = 'u32[]', space=smem, size = 0x4, offset = 0x4, fixed_abs, tag = 'smem constant byte address 0x4 - core index']
  #allocation1 [shape = 'u32[72,128]{1,0:T(1,128)}', space=vmem, size = 0x9000, scoped, tag = 'internal scratch']
  #allocation2 [shape = 'f32[8,128]{1,0:T(8,128)}', space=vmem, size = 0x1000, scoped, tag = 'scratch operand']
  #allocation3 [shape = 'f32[8,128]{1,0:T(8,128)}', space=vmem, size = 0x1000, scoped, tag = 'scratch operand']
  %s0 = inlined_call_operand.vmem [shape: bf16[8,8,512], index: 0, kind: input, shape index: {}]
  %s1 = inlined_call_operand.vmem [shape: bf16[128,512], index: 1, kind: input, shape index: {}]
  %s2 = inlined_call_operand.vmem [shape: bf16[128,50], index: 2, kind: input, shape index: {}]
  %s3 = inlined_call_operand.vmem [shape: f32[1,50], index: 3, kind: input, shape index: {}]
  %s4 = inlined_call_operand.vmem [shape: f32[8,128], index: 4, kind: input, shape index: {}]
  %s5 = inlined_call_operand.vmem [shape: f32[8,128], index: 5, kind: input, shape index: {}]
  %s6 = inlined_call_operand.hbm [shape: f32[8,8,50], index: 6, kind: output, shape index: {0}]
  %s7 = inlined_call_operand.hbm [shape: f32[8,128], index: 7, kind: output, shape index: {1}]
  %s8 = inlined_call_operand.hbm [shape: f32[8,128], index: 8, kind: output, shape index: {2}]
  %9 = xla_tuple %s6, %s7, %s8
  %s10 = sld [smem:[#allocation0]]
  $region54: #{ptb_model_forward.1} parent=0
    _
  %s12 = ssub.s32 1, %s10
  %s13 = scalar_select 0, %s12, %s10
  $region1: #{ptb_model_forward.1} parent=0
    #allocation4 [shape = 'u8[32768]{0}', space=vmem, size = 0x8000, scoped, tag = 'output window, operand 0, single buffered']
    #allocation5 [shape = 's32[1]{0}', space=sflag, size = 0x4, scoped, tag = 'scoped memory for ptb_model_forward.1']
    #allocation6 [shape = 'u8[4096]{0}', space=vmem, size = 0x1000, scoped, tag = 'output window, operand 1, single buffered']
    #allocation7 [shape = 's32[1]{0}', space=sflag, size = 0x4, scoped, tag = 'scoped memory for ptb_model_forward.1']
    #allocation8 [shape = 'u8[4096]{0}', space=vmem, size = 0x1000, scoped, tag = 'output window, operand 2, single buffered']
    %14 = vsyncpa [#allocation5], 0
    %15 = vsyncpa [#allocation7], 0
    // Predicated region
    $region2: #{ptb_model_forward.1} parent=1 // pred_check
      _
    $region3: #{ptb_model_forward.1} parent=1 // pred_check_branch
      %17 = sbr.rel (0) target = $region5
    $region4: #{ptb_model_forward.1} parent=1 // pred_region
      _
    $region5: #{ptb_model_forward.1} parent=1 // pred_fallthru
      _
    // Predicated region
    $region6: #{ptb_model_forward.1} parent=1 // pred_check
      _
    $region7: #{ptb_model_forward.1} parent=1 // pred_check_branch
      %19 = sbr.rel (0) target = $region9
    $region8: #{ptb_model_forward.1} parent=1 // pred_region
      _
    $region9: #{ptb_model_forward.1} parent=1 // pred_fallthru
      _
    // Predicated region
    $region10: #{ptb_model_forward.1} parent=1 // pred_check
      _
    $region11: #{ptb_model_forward.1} parent=1 // pred_check_branch
      %21 = sbr.rel (0) target = $region13
    $region12: #{ptb_model_forward.1} parent=1 // pred_region
      _
    $region13: #{ptb_model_forward.1} parent=1 // pred_fallthru
      _
    // Predicated region
    $region14: #{ptb_model_forward.1} parent=1 // pred_check
      _
    $region15: #{ptb_model_forward.1} parent=1 // pred_check_branch
      %23 = sbr.rel (0) target = $region17
    $region16: #{ptb_model_forward.1} parent=1 // pred_region
      _
    $region17: #{ptb_model_forward.1} parent=1 // pred_fallthru
      _
    // Predicated region
    $region18: #{ptb_model_forward.1} parent=1 // pred_check
      _
    $region19: #{ptb_model_forward.1} parent=1 // pred_check_branch
      %25 = sbr.rel (0) target = $region21
    $region20: #{ptb_model_forward.1} parent=1 // pred_region
      _
    $region21: #{ptb_model_forward.1} parent=1 // pred_fallthru
      _
    // Predicated region
    $region22: #{ptb_model_forward.1} parent=1 // pred_check
      _
    $region23: #{ptb_model_forward.1} parent=1 // pred_check_branch
      %27 = sbr.rel (0) target = $region25
    $region24: #{ptb_model_forward.1} parent=1 // pred_region
      _
    $region25: #{ptb_model_forward.1} parent=1 // pred_fallthru
      _
    %p28 = scmp.eq.s32.totalorder 0, 0
    // Predicated region
    $region26: #{ptb_model_forward.1} parent=1 // pred_check
      %p29 = pneg %p28
    $region27: #{ptb_model_forward.1} parent=1 // pred_check_branch
      %31 = sbr.rel (%p29) target = $region29
    $region28: #{ptb_model_forward.1} parent=1 // pred_region
      %v32 = vld [vmem:[%s4] sm:$0xff]
      %33 = vst [vmem:[#allocation2] sm:$0xff] %v32
      %v34 = vld [vmem:[%s5] sm:$0xff]
      %35 = vst [vmem:[#allocation3] sm:$0xff] %v34
    $region29: #{ptb_model_forward.1} parent=1 // pred_fallthru
      _
    %v36 = vld [vmem:[%s1] sm:$0xff]
    %v37 = vld [vmem:[%s1 + $0x8] sm:$0xff]
    %v38 = vld [vmem:[%s1 + $0x10] sm:$0xff]
    %v39 = vld [vmem:[%s1 + $0x18] sm:$0xff]
    %v40 = vld [vmem:[%s1 + $0x20] sm:$0xff]
    %v41 = vld [vmem:[%s1 + $0x28] sm:$0xff]
    %v42 = vld [vmem:[%s1 + $0x30] sm:$0xff]
    %v43 = vld [vmem:[%s1 + $0x38] sm:$0xff]
    %v44 = vld [vmem:[%s1 + $0x40] sm:$0xff]
    %v45 = vld [vmem:[%s1 + $0x48] sm:$0xff]
    %v46 = vld [vmem:[%s1 + $0x50] sm:$0xff]
    %v47 = vld [vmem:[%s1 + $0x58] sm:$0xff]
    %v48 = vld [vmem:[%s1 + $0x60] sm:$0xff]
    %v49 = vld [vmem:[%s1 + $0x68] sm:$0xff]
    %v50 = vld [vmem:[%s1 + $0x70] sm:$0xff]
    %v51 = vld [vmem:[%s1 + $0x78] sm:$0xff]
    %v52 = vld [vmem:[%s1 + $0x80] sm:$0xff]
    %v53 = vld [vmem:[%s1 + $0x88] sm:$0xff]
    %v54 = vld [vmem:[%s1 + $0x90] sm:$0xff]
    %v55 = vld [vmem:[%s1 + $0x98] sm:$0xff]
    %v56 = vld [vmem:[%s1 + $0xa0] sm:$0xff]
    %v57 = vld [vmem:[%s1 + $0xa8] sm:$0xff]
    %v58 = vld [vmem:[%s1 + $0xb0] sm:$0xff]
    %v59 = vld [vmem:[%s1 + $0xb8] sm:$0xff]
    %v60 = vld [vmem:[%s1 + $0xc0] sm:$0xff]
    %v61 = vld [vmem:[%s1 + $0xc8] sm:$0xff]
    %v62 = vld [vmem:[%s1 + $0xd0] sm:$0xff]
    %v63 = vld [vmem:[%s1 + $0xd8] sm:$0xff]
    %v64 = vld [vmem:[%s1 + $0xe0] sm:$0xff]
    %v65 = vld [vmem:[%s1 + $0xe8] sm:$0xff]
    %v66 = vld [vmem:[%s1 + $0xf0] sm:$0xff]
    %v67 = vld [vmem:[%s1 + $0xf8] sm:$0xff]
    %v68 = vld [vmem:[%s2] sm:$0xf]
    %v69 = vld [vmem:[%s2 + $0x4] sm:$0xf]
    %v70 = vld [vmem:[%s2 + $0x8] sm:$0xf]
    %v71 = vld [vmem:[%s2 + $0xc] sm:$0xf]
    %v72 = vld [vmem:[%s2 + $0x10] sm:$0xf]
    %v73 = vld [vmem:[%s2 + $0x14] sm:$0xf]
    %v74 = vld [vmem:[%s2 + $0x18] sm:$0xf]
    %v75 = vld [vmem:[%s2 + $0x1c] sm:$0xf]
    %v76 = vld [vmem:[%s2 + $0x20] sm:$0xf]
    %v77 = vld [vmem:[%s2 + $0x24] sm:$0xf]
    %v78 = vld [vmem:[%s2 + $0x28] sm:$0xf]
    %v79 = vld [vmem:[%s2 + $0x2c] sm:$0xf]
    %v80 = vld [vmem:[%s2 + $0x30] sm:$0xf]
    %v81 = vld [vmem:[%s2 + $0x34] sm:$0xf]
    %v82 = vld [vmem:[%s2 + $0x38] sm:$0xf]
    %v83 = vld [vmem:[%s2 + $0x3c] sm:$0xf]
    %v84 = vld [vmem:[%s3] sm:$0x1]
    %v86 = vperm.slane %v84, 0
    %v88 = vld [vmem:[#allocation2] sm:$0xff]
    %v89 = vld [vmem:[#allocation3] sm:$0xff]
    %v90 = vpack.c.bf16 %v88, %v88
    %v91 = vld [vmem:[%s0] sm:$0xff]
    %v92 = vld [vmem:[%s0 + $0x8] sm:$0xff]
    %v93 = vunpack.c.l.bf16 %v91
    %v94 = vunpack.c.h.bf16 %v91
    %v95 = vunpack.c.l.bf16 %v92
    %v96 = vunpack.c.h.bf16 %v92
    %v129 = vunpack.c.l.b16 %v36
    %v130 = vunpack.c.h.b16 %v36
    %v131 = vunpack.c.l.b16 %v37
    %v132 = vunpack.c.h.b16 %v37
    %v133 = vunpack.c.l.b16 %v38
    %v134 = vunpack.c.h.b16 %v38
    %v135 = vunpack.c.l.b16 %v39
    %v136 = vunpack.c.h.b16 %v39
    %v137 = vunpack.c.l.b16 %v40
    %v138 = vunpack.c.h.b16 %v40
    %v139 = vunpack.c.l.b16 %v41
    %v140 = vunpack.c.h.b16 %v41
    %v141 = vunpack.c.l.b16 %v42
    %v142 = vunpack.c.h.b16 %v42
    %v143 = vunpack.c.l.b16 %v43
    %v144 = vunpack.c.h.b16 %v43
    %v145 = vunpack.c.l.b16 %v44
    %v146 = vunpack.c.h.b16 %v44
    %v147 = vunpack.c.l.b16 %v45
    %v148 = vunpack.c.h.b16 %v45
    %v149 = vunpack.c.l.b16 %v46
    %v150 = vunpack.c.h.b16 %v46
    %v151 = vunpack.c.l.b16 %v47
    %v152 = vunpack.c.h.b16 %v47
    %v153 = vunpack.c.l.b16 %v48
    %v154 = vunpack.c.h.b16 %v48
    %v155 = vunpack.c.l.b16 %v49
    %v156 = vunpack.c.h.b16 %v49
    %v157 = vunpack.c.l.b16 %v50
    %v158 = vunpack.c.h.b16 %v50
    %v159 = vunpack.c.l.b16 %v51
    %v160 = vunpack.c.h.b16 %v51
    %v161 = vunpack.c.l.b16 %v52
    %v162 = vunpack.c.h.b16 %v52
    %v163 = vunpack.c.l.b16 %v53
    %v164 = vunpack.c.h.b16 %v53
    %v165 = vunpack.c.l.b16 %v54
    %v166 = vunpack.c.h.b16 %v54
    %v167 = vunpack.c.l.b16 %v55
    %v168 = vunpack.c.h.b16 %v55
    %v169 = vunpack.c.l.b16 %v56
    %v170 = vunpack.c.h.b16 %v56
    %v171 = vunpack.c.l.b16 %v57
    %v172 = vunpack.c.h.b16 %v57
    %v173 = vunpack.c.l.b16 %v58
    %v174 = vunpack.c.h.b16 %v58
    %v175 = vunpack.c.l.b16 %v59
    %v176 = vunpack.c.h.b16 %v59
    %v177 = vunpack.c.l.b16 %v60
    %v178 = vunpack.c.h.b16 %v60
    %v179 = vunpack.c.l.b16 %v61
    %v180 = vunpack.c.h.b16 %v61
    %v181 = vunpack.c.l.b16 %v62
    %v182 = vunpack.c.h.b16 %v62
    %v183 = vunpack.c.l.b16 %v63
    %v184 = vunpack.c.h.b16 %v63
    %v185 = vunpack.c.l.b16 %v64
    %v186 = vunpack.c.h.b16 %v64
    %v187 = vunpack.c.l.b16 %v65
    %v188 = vunpack.c.h.b16 %v65
    %v189 = vunpack.c.l.b16 %v66
    %v190 = vunpack.c.h.b16 %v66
    %v191 = vunpack.c.l.b16 %v67
    %v192 = vunpack.c.h.b16 %v67
    %v193 = vpack.c.b16 %v133, %v129
    %v194 = vpack.c.b16 %v134, %v130
    %v195 = vpack.c.b16 %v135, %v131
    %v196 = vpack.c.b16 %v136, %v132
    %v197 = vpack.c.b16 %v141, %v137
    %v198 = vpack.c.b16 %v142, %v138
    %v199 = vpack.c.b16 %v143, %v139
    %v200 = vpack.c.b16 %v144, %v140
    %v201 = vpack.c.b16 %v149, %v145
    %v202 = vpack.c.b16 %v150, %v146
    %v203 = vpack.c.b16 %v151, %v147
    %v204 = vpack.c.b16 %v152, %v148
    %v205 = vpack.c.b16 %v157, %v153
    %v206 = vpack.c.b16 %v158, %v154
    %v207 = vpack.c.b16 %v159, %v155
    %v208 = vpack.c.b16 %v160, %v156
    %v209 = vpack.c.b16 %v165, %v161
    %v210 = vpack.c.b16 %v166, %v162
    %v211 = vpack.c.b16 %v167, %v163
    %v212 = vpack.c.b16 %v168, %v164
    %v213 = vpack.c.b16 %v173, %v169
    %v214 = vpack.c.b16 %v174, %v170
    %v215 = vpack.c.b16 %v175, %v171
    %v216 = vpack.c.b16 %v176, %v172
    %v217 = vpack.c.b16 %v181, %v177
    %v218 = vpack.c.b16 %v182, %v178
    %v219 = vpack.c.b16 %v183, %v179
    %v220 = vpack.c.b16 %v184, %v180
    %v221 = vpack.c.b16 %v189, %v185
    %v222 = vpack.c.b16 %v190, %v186
    %v223 = vpack.c.b16 %v191, %v187
    %v224 = vpack.c.b16 %v192, %v188
    %257 = vmatpush.bf16.msra.mxu0 %v221
    %258 = vmatpush.bf16.msra.mxu0 %v217
    %259 = vmatpush.bf16.msra.mxu0 %v213
    %260 = vmatpush.bf16.msra.mxu0 %v209
    %261 = vmatpush.bf16.msra.mxu0 %v205
    %262 = vmatpush.bf16.msra.mxu0 %v201
    %263 = vmatpush.bf16.msra.mxu0 %v197
    %264 = vmatpush.bf16.msra.mxu0 %v193
    %265 = vmatmul.bf16.gmra.mxu0 %v90
    %v266 = vpop.f32.mrf.mxu0
    %v267 = vadd.f32 %v93, %v266
    %v268 = vpop.f32.mrf.mxu0
    %269 = vdwg.mxu0
    %270 = vmatpush.bf16.msra.mxu0 %v222
    %271 = vmatpush.bf16.msra.mxu0 %v218
    %272 = vmatpush.bf16.msra.mxu0 %v214
    %273 = vmatpush.bf16.msra.mxu0 %v210
    %274 = vmatpush.bf16.msra.mxu0 %v206
    %275 = vmatpush.bf16.msra.mxu0 %v202
    %276 = vmatpush.bf16.msra.mxu0 %v198
    %277 = vmatpush.bf16.msra.mxu0 %v194
    %278 = vmatmul.bf16.gmra.mxu0 %v90
    %v279 = vpop.f32.mrf.mxu0
    %v280 = vadd.f32 %v94, %v279
    %v281 = vpop.f32.mrf.mxu0
    %282 = vdwg.mxu0
    %283 = vmatpush.bf16.msra.mxu0 %v223
    %284 = vmatpush.bf16.msra.mxu0 %v219
    %285 = vmatpush.bf16.msra.mxu0 %v215
    %286 = vmatpush.bf16.msra.mxu0 %v211
    %287 = vmatpush.bf16.msra.mxu0 %v207
    %288 = vmatpush.bf16.msra.mxu0 %v203
    %289 = vmatpush.bf16.msra.mxu0 %v199
    %290 = vmatpush.bf16.msra.mxu0 %v195
    %291 = vmatmul.bf16.gmra.mxu0 %v90
    %v292 = vpop.f32.mrf.mxu0
    %v293 = vadd.f32 %v95, %v292
    %v294 = vpop.f32.mrf.mxu0
    %295 = vdwg.mxu0
    %296 = vmatpush.bf16.msra.mxu0 %v224
    %297 = vmatpush.bf16.msra.mxu0 %v220
    %298 = vmatpush.bf16.msra.mxu0 %v216
    %299 = vmatpush.bf16.msra.mxu0 %v212
    %300 = vmatpush.bf16.msra.mxu0 %v208
    %301 = vmatpush.bf16.msra.mxu0 %v204
    %302 = vmatpush.bf16.msra.mxu0 %v200
    %303 = vmatpush.bf16.msra.mxu0 %v196
    %304 = vmatmul.bf16.gmra.mxu0 %v90
    %v305 = vpop.f32.mrf.mxu0
    %v306 = vadd.f32 %v96, %v305
    %v307 = vpop.f32.mrf.mxu0
    %308 = vdwg.mxu0
    %v309 = vxor.u32 %v267, 2147483648
    %v310 = vxor.u32 %v280, 2147483648
    %v311 = vxor.u32 %v293, 2147483648
    %v312 = vmul.f32 %v309, 1.442695
    %v313 = vpow.pop %v312
    %v314 = vmul.f32 %v310, 1.442695
    %v315 = vpow.pop %v314
    %v316 = vmul.f32 %v311, 1.442695
    %v317 = vpow.pop %v316
    %v318 = vadd.f32 %v313, 1.0
    %v319 = vadd.f32 %v315, 1.0
    %v320 = vadd.f32 %v317, 1.0
    %v321 = vrcp.pop %v318
    %v322 = vmul.f32 %v318, %v321
    %v323 = vsub.f32 1.0, %v322
    %v324 = vmul.f32 %v321, %v323
    %v325 = vadd.f32 %v321, %v324
    %vm326 = vweird.f32 %v318
    %vm327 = vweird.f32 %v321
    %vm328 = vmor %vm326, %vm327
    %v329 = vsel %vm328, %v321, %v325
    %v330 = vand.u32 2147483647, %v318
    %vm331 = vcmp.eq.f32.partialorder %v330, 8.507059e+37
    %v332 = vand.u32 %v318, 2147483648
    %v333 = vor.u32 1.1754944e-38, %v332
    %v334 = vsel %vm331, %v333, %v329
    %v335 = vmul.f32 1.0, %v334
    %v336 = vrcp.pop %v319
    %v337 = vmul.f32 %v319, %v336
    %v338 = vsub.f32 1.0, %v337
    %v339 = vmul.f32 %v336, %v338
    %v340 = vadd.f32 %v336, %v339
    %vm341 = vweird.f32 %v319
    %vm342 = vweird.f32 %v336
    %vm343 = vmor %vm341, %vm342
    %v344 = vsel %vm343, %v336, %v340
    %v345 = vand.u32 2147483647, %v319
    %vm346 = vcmp.eq.f32.partialorder %v345, 8.507059e+37
    %v347 = vand.u32 %v319, 2147483648
    %v348 = vor.u32 1.1754944e-38, %v347
    %v349 = vsel %vm346, %v348, %v344
    %v350 = vmul.f32 1.0, %v349
    %v351 = vrcp.pop %v320
    %v352 = vmul.f32 %v320, %v351
    %v353 = vsub.f32 1.0, %v352
    %v354 = vmul.f32 %v351, %v353
    %v355 = vadd.f32 %v351, %v354
    %vm356 = vweird.f32 %v320
    %vm357 = vweird.f32 %v351
    %vm358 = vmor %vm356, %vm357
    %v359 = vsel %vm358, %v351, %v355
    %v360 = vand.u32 2147483647, %v320
    %vm361 = vcmp.eq.f32.partialorder %v360, 8.507059e+37
    %v362 = vand.u32 %v320, 2147483648
    %v363 = vor.u32 1.1754944e-38, %v362
    %v364 = vsel %vm361, %v363, %v359
    %v365 = vmul.f32 1.0, %v364
    %v366 = vtanh.pop %v306
    %v367 = vmul.f32 %v350, %v89
    %v368 = vmul.f32 %v335, %v366
    %v369 = vadd.f32 %v367, %v368
    %v370 = vtanh.pop %v369
    %v371 = vmul.f32 %v365, %v370
    %v372 = vpack.c.bf16 %v371, %v371
    %v389 = vunpack.c.l.b16 %v68
    %v390 = vunpack.c.l.b16 %v69
    %v391 = vunpack.c.l.b16 %v70
    %v392 = vunpack.c.l.b16 %v71
    %v393 = vunpack.c.l.b16 %v72
    %v394 = vunpack.c.l.b16 %v73
    %v395 = vunpack.c.l.b16 %v74
    %v396 = vunpack.c.l.b16 %v75
    %v397 = vunpack.c.l.b16 %v76
    %v398 = vunpack.c.l.b16 %v77
    %v399 = vunpack.c.l.b16 %v78
    %v400 = vunpack.c.l.b16 %v79
    %v401 = vunpack.c.l.b16 %v80
    %v402 = vunpack.c.l.b16 %v81
    %v403 = vunpack.c.l.b16 %v82
    %v404 = vunpack.c.l.b16 %v83
    %v405 = vpack.c.b16 %v390, %v389
    %v406 = vpack.c.b16 %v392, %v391
    %v407 = vpack.c.b16 %v394, %v393
    %v408 = vpack.c.b16 %v396, %v395
    %v409 = vpack.c.b16 %v398, %v397
    %v410 = vpack.c.b16 %v400, %v399
    %v411 = vpack.c.b16 %v402, %v401
    %v412 = vpack.c.b16 %v404, %v403
    %421 = vmatpush.bf16.msra.mxu0 %v412
    %422 = vmatpush.bf16.msra.mxu0 %v411
    %423 = vmatpush.bf16.msra.mxu0 %v410
    %424 = vmatpush.bf16.msra.mxu0 %v409
    %425 = vmatpush.bf16.msra.mxu0 %v408
    %426 = vmatpush.bf16.msra.mxu0 %v407
    %427 = vmatpush.bf16.msra.mxu0 %v406
    %428 = vmatpush.bf16.msra.mxu0 %v405
    %429 = vmatmul.bf16.gmra.mxu0 %v372
    %v430 = vpop.f32.mrf.mxu0
    %v431 = vadd.f32 %v86, %v430
    %v432 = vpop.f32.mrf.mxu0
    %433 = vdwg.mxu0
    %vm434 = vcmask 408576
    %435 = vst.msk [vmem:[#allocation4] sm:$0xff] %vm434, %v431
    %s436 = scalar_lea.vmem %s0, 16
    %v437 = vld [vmem:[%s436] sm:$0xff]
    %v438 = vld [vmem:[%s436 + $0x8] sm:$0xff]
    %v439 = vunpack.c.l.bf16 %v437
    %v440 = vunpack.c.h.bf16 %v437
    %v441 = vunpack.c.l.bf16 %v438
    %v442 = vunpack.c.h.bf16 %v438
    %443 = vmatpush.bf16.msra.mxu0 %v221
    %444 = vmatpush.bf16.msra.mxu0 %v217
    %445 = vmatpush.bf16.msra.mxu0 %v213
    %446 = vmatpush.bf16.msra.mxu0 %v209
    %447 = vmatpush.bf16.msra.mxu0 %v205
    %448 = vmatpush.bf16.msra.mxu0 %v201
    %449 = vmatpush.bf16.msra.mxu0 %v197
    %450 = vmatpush.bf16.msra.mxu0 %v193
    %451 = vmatmul.bf16.gmra.mxu0 %v372
    %v452 = vpop.f32.mrf.mxu0
    %v453 = vadd.f32 %v439, %v452
    %v454 = vpop.f32.mrf.mxu0
    %455 = vdwg.mxu0
    %456 = vmatpush.bf16.msra.mxu0 %v222
    %457 = vmatpush.bf16.msra.mxu0 %v218
    %458 = vmatpush.bf16.msra.mxu0 %v214
    %459 = vmatpush.bf16.msra.mxu0 %v210
    %460 = vmatpush.bf16.msra.mxu0 %v206
    %461 = vmatpush.bf16.msra.mxu0 %v202
    %462 = vmatpush.bf16.msra.mxu0 %v198
    %463 = vmatpush.bf16.msra.mxu0 %v194
    %464 = vmatmul.bf16.gmra.mxu0 %v372
    %v465 = vpop.f32.mrf.mxu0
    %v466 = vadd.f32 %v440, %v465
    %v467 = vpop.f32.mrf.mxu0
    %468 = vdwg.mxu0
    %469 = vmatpush.bf16.msra.mxu0 %v223
    %470 = vmatpush.bf16.msra.mxu0 %v219
    %471 = vmatpush.bf16.msra.mxu0 %v215
    %472 = vmatpush.bf16.msra.mxu0 %v211
    %473 = vmatpush.bf16.msra.mxu0 %v207
    %474 = vmatpush.bf16.msra.mxu0 %v203
    %475 = vmatpush.bf16.msra.mxu0 %v199
    %476 = vmatpush.bf16.msra.mxu0 %v195
    %477 = vmatmul.bf16.gmra.mxu0 %v372
    %v478 = vpop.f32.mrf.mxu0
    %v479 = vadd.f32 %v441, %v478
    %v480 = vpop.f32.mrf.mxu0
    %481 = vdwg.mxu0
    %482 = vmatpush.bf16.msra.mxu0 %v224
    %483 = vmatpush.bf16.msra.mxu0 %v220
    %484 = vmatpush.bf16.msra.mxu0 %v216
    %485 = vmatpush.bf16.msra.mxu0 %v212
    %486 = vmatpush.bf16.msra.mxu0 %v208
    %487 = vmatpush.bf16.msra.mxu0 %v204
    %488 = vmatpush.bf16.msra.mxu0 %v200
    %489 = vmatpush.bf16.msra.mxu0 %v196
    %490 = vmatmul.bf16.gmra.mxu0 %v372
    %v491 = vpop.f32.mrf.mxu0
    %v492 = vadd.f32 %v442, %v491
    %v493 = vpop.f32.mrf.mxu0
    %494 = vdwg.mxu0
    %v495 = vxor.u32 %v453, 2147483648
    %v496 = vxor.u32 %v466, 2147483648
    %v497 = vxor.u32 %v479, 2147483648
    %v498 = vmul.f32 %v495, 1.442695
    %v499 = vpow.pop %v498
    %v500 = vmul.f32 %v496, 1.442695
    %v501 = vpow.pop %v500
    %v502 = vmul.f32 %v497, 1.442695
    %v503 = vpow.pop %v502
    %v504 = vadd.f32 %v499, 1.0
    %v505 = vadd.f32 %v501, 1.0
    %v506 = vadd.f32 %v503, 1.0
    %v507 = vrcp.pop %v504
    %v508 = vmul.f32 %v504, %v507
    %v509 = vsub.f32 1.0, %v508
    %v510 = vmul.f32 %v507, %v509
    %v511 = vadd.f32 %v507, %v510
    %vm512 = vweird.f32 %v504
    %vm513 = vweird.f32 %v507
    %vm514 = vmor %vm512, %vm513
    %v515 = vsel %vm514, %v507, %v511
    %v516 = vand.u32 2147483647, %v504
    %vm517 = vcmp.eq.f32.partialorder %v516, 8.507059e+37
    %v518 = vand.u32 %v504, 2147483648
    %v519 = vor.u32 1.1754944e-38, %v518
    %v520 = vsel %vm517, %v519, %v515
    %v521 = vmul.f32 1.0, %v520
    %v522 = vrcp.pop %v505
    %v523 = vmul.f32 %v505, %v522
    %v524 = vsub.f32 1.0, %v523
    %v525 = vmul.f32 %v522, %v524
    %v526 = vadd.f32 %v522, %v525
    %vm527 = vweird.f32 %v505
    %vm528 = vweird.f32 %v522
    %vm529 = vmor %vm527, %vm528
    %v530 = vsel %vm529, %v522, %v526
    %v531 = vand.u32 2147483647, %v505
    %vm532 = vcmp.eq.f32.partialorder %v531, 8.507059e+37
    %v533 = vand.u32 %v505, 2147483648
    %v534 = vor.u32 1.1754944e-38, %v533
    %v535 = vsel %vm532, %v534, %v530
    %v536 = vmul.f32 1.0, %v535
    %v537 = vrcp.pop %v506
    %v538 = vmul.f32 %v506, %v537
    %v539 = vsub.f32 1.0, %v538
    %v540 = vmul.f32 %v537, %v539
    %v541 = vadd.f32 %v537, %v540
    %vm542 = vweird.f32 %v506
    %vm543 = vweird.f32 %v537
    %vm544 = vmor %vm542, %vm543
    %v545 = vsel %vm544, %v537, %v541
    %v546 = vand.u32 2147483647, %v506
    %vm547 = vcmp.eq.f32.partialorder %v546, 8.507059e+37
    %v548 = vand.u32 %v506, 2147483648
    %v549 = vor.u32 1.1754944e-38, %v548
    %v550 = vsel %vm547, %v549, %v545
    %v551 = vmul.f32 1.0, %v550
    %v552 = vtanh.pop %v492
    %v553 = vmul.f32 %v536, %v369
    %v554 = vmul.f32 %v521, %v552
    %v555 = vadd.f32 %v553, %v554
    %v556 = vtanh.pop %v555
    %v557 = vmul.f32 %v551, %v556
    %v558 = vpack.c.bf16 %v557, %v557
    %559 = vmatpush.bf16.msra.mxu0 %v412
    %560 = vmatpush.bf16.msra.mxu0 %v411
    %561 = vmatpush.bf16.msra.mxu0 %v410
    %562 = vmatpush.bf16.msra.mxu0 %v409
    %563 = vmatpush.bf16.msra.mxu0 %v408
    %564 = vmatpush.bf16.msra.mxu0 %v407
    %565 = vmatpush.bf16.msra.mxu0 %v406
    %566 = vmatpush.bf16.msra.mxu0 %v405
    %567 = vmatmul.bf16.gmra.mxu0 %v558
    %v568 = vpop.f32.mrf.mxu0
    %v569 = vadd.f32 %v86, %v568
    %v570 = vpop.f32.mrf.mxu0
    %571 = vdwg.mxu0
    %s572 = scalar_lea.vmem [#allocation4], 8
    %573 = vst.msk [vmem:[%s572] sm:$0xff] %vm434, %v569
    %s574 = scalar_lea.vmem %s0, 32
    %v575 = vld [vmem:[%s574] sm:$0xff]
    %v576 = vld [vmem:[%s574 + $0x8] sm:$0xff]
    %v577 = vunpack.c.l.bf16 %v575
    %v578 = vunpack.c.h.bf16 %v575
    %v579 = vunpack.c.l.bf16 %v576
    %v580 = vunpack.c.h.bf16 %v576
    %581 = vmatpush.bf16.msra.mxu0 %v221
    %582 = vmatpush.bf16.msra.mxu0 %v217
    %583 = vmatpush.bf16.msra.mxu0 %v213
    %584 = vmatpush.bf16.msra.mxu0 %v209
    %585 = vmatpush.bf16.msra.mxu0 %v205
    %586 = vmatpush.bf16.msra.mxu0 %v201
    %587 = vmatpush.bf16.msra.mxu0 %v197
    %588 = vmatpush.bf16.msra.mxu0 %v193
    %589 = vmatmul.bf16.gmra.mxu0 %v558
    %v590 = vpop.f32.mrf.mxu0
    %v591 = vadd.f32 %v577, %v590
    %v592 = vpop.f32.mrf.mxu0
    %593 = vdwg.mxu0
    %594 = vmatpush.bf16.msra.mxu0 %v222
    %595 = vmatpush.bf16.msra.mxu0 %v218
    %596 = vmatpush.bf16.msra.mxu0 %v214
    %597 = vmatpush.bf16.msra.mxu0 %v210
    %598 = vmatpush.bf16.msra.mxu0 %v206
    %599 = vmatpush.bf16.msra.mxu0 %v202
    %600 = vmatpush.bf16.msra.mxu0 %v198
    %601 = vmatpush.bf16.msra.mxu0 %v194
    %602 = vmatmul.bf16.gmra.mxu0 %v558
    %v603 = vpop.f32.mrf.mxu0
    %v604 = vadd.f32 %v578, %v603
    %v605 = vpop.f32.mrf.mxu0
    %606 = vdwg.mxu0
    %607 = vmatpush.bf16.msra.mxu0 %v223
    %608 = vmatpush.bf16.msra.mxu0 %v219
    %609 = vmatpush.bf16.msra.mxu0 %v215
    %610 = vmatpush.bf16.msra.mxu0 %v211
    %611 = vmatpush.bf16.msra.mxu0 %v207
    %612 = vmatpush.bf16.msra.mxu0 %v203
    %613 = vmatpush.bf16.msra.mxu0 %v199
    %614 = vmatpush.bf16.msra.mxu0 %v195
    %615 = vmatmul.bf16.gmra.mxu0 %v558
    %v616 = vpop.f32.mrf.mxu0
    %v617 = vadd.f32 %v579, %v616
    %v618 = vpop.f32.mrf.mxu0
    %619 = vdwg.mxu0
    %620 = vmatpush.bf16.msra.mxu0 %v224
    %621 = vmatpush.bf16.msra.mxu0 %v220
    %622 = vmatpush.bf16.msra.mxu0 %v216
    %623 = vmatpush.bf16.msra.mxu0 %v212
    %624 = vmatpush.bf16.msra.mxu0 %v208
    %625 = vmatpush.bf16.msra.mxu0 %v204
    %626 = vmatpush.bf16.msra.mxu0 %v200
    %627 = vmatpush.bf16.msra.mxu0 %v196
    %628 = vmatmul.bf16.gmra.mxu0 %v558
    %v629 = vpop.f32.mrf.mxu0
    %v630 = vadd.f32 %v580, %v629
    %v631 = vpop.f32.mrf.mxu0
    %632 = vdwg.mxu0
    %v633 = vxor.u32 %v591, 2147483648
    %v634 = vxor.u32 %v604, 2147483648
    %v635 = vxor.u32 %v617, 2147483648
    %v636 = vmul.f32 %v633, 1.442695
    %v637 = vpow.pop %v636
    %v638 = vmul.f32 %v634, 1.442695
    %v639 = vpow.pop %v638
    %v640 = vmul.f32 %v635, 1.442695
    %v641 = vpow.pop %v640
    %v642 = vadd.f32 %v637, 1.0
    %v643 = vadd.f32 %v639, 1.0
    %v644 = vadd.f32 %v641, 1.0
    %v645 = vrcp.pop %v642
    %v646 = vmul.f32 %v642, %v645
    %v647 = vsub.f32 1.0, %v646
    %v648 = vmul.f32 %v645, %v647
    %v649 = vadd.f32 %v645, %v648
    %vm650 = vweird.f32 %v642
    %vm651 = vweird.f32 %v645
    %vm652 = vmor %vm650, %vm651
    %v653 = vsel %vm652, %v645, %v649
    %v654 = vand.u32 2147483647, %v642
    %vm655 = vcmp.eq.f32.partialorder %v654, 8.507059e+37
    %v656 = vand.u32 %v642, 2147483648
    %v657 = vor.u32 1.1754944e-38, %v656
    %v658 = vsel %vm655, %v657, %v653
    %v659 = vmul.f32 1.0, %v658
    %v660 = vrcp.pop %v643
    %v661 = vmul.f32 %v643, %v660
    %v662 = vsub.f32 1.0, %v661
    %v663 = vmul.f32 %v660, %v662
    %v664 = vadd.f32 %v660, %v663
    %vm665 = vweird.f32 %v643
    %vm666 = vweird.f32 %v660
    %vm667 = vmor %vm665, %vm666
    %v668 = vsel %vm667, %v660, %v664
    %v669 = vand.u32 2147483647, %v643
    %vm670 = vcmp.eq.f32.partialorder %v669, 8.507059e+37
    %v671 = vand.u32 %v643, 2147483648
    %v672 = vor.u32 1.1754944e-38, %v671
    %v673 = vsel %vm670, %v672, %v668
    %v674 = vmul.f32 1.0, %v673
    %v675 = vrcp.pop %v644
    %v676 = vmul.f32 %v644, %v675
    %v677 = vsub.f32 1.0, %v676
    %v678 = vmul.f32 %v675, %v677
    %v679 = vadd.f32 %v675, %v678
    %vm680 = vweird.f32 %v644
    %vm681 = vweird.f32 %v675
    %vm682 = vmor %vm680, %vm681
    %v683 = vsel %vm682, %v675, %v679
    %v684 = vand.u32 2147483647, %v644
    %vm685 = vcmp.eq.f32.partialorder %v684, 8.507059e+37
    %v686 = vand.u32 %v644, 2147483648
    %v687 = vor.u32 1.1754944e-38, %v686
    %v688 = vsel %vm685, %v687, %v683
    %v689 = vmul.f32 1.0, %v688
    %v690 = vtanh.pop %v630
    %v691 = vmul.f32 %v674, %v555
    %v692 = vmul.f32 %v659, %v690
    %v693 = vadd.f32 %v691, %v692
    %v694 = vtanh.pop %v693
    %v695 = vmul.f32 %v689, %v694
    %v696 = vpack.c.bf16 %v695, %v695
    %697 = vmatpush.bf16.msra.mxu0 %v412
    %698 = vmatpush.bf16.msra.mxu0 %v411
    %699 = vmatpush.bf16.msra.mxu0 %v410
    %700 = vmatpush.bf16.msra.mxu0 %v409
    %701 = vmatpush.bf16.msra.mxu0 %v408
    %702 = vmatpush.bf16.msra.mxu0 %v407
    %703 = vmatpush.bf16.msra.mxu0 %v406
    %704 = vmatpush.bf16.msra.mxu0 %v405
    %705 = vmatmul.bf16.gmra.mxu0 %v696
    %v706 = vpop.f32.mrf.mxu0
    %v707 = vadd.f32 %v86, %v706
    %v708 = vpop.f32.mrf.mxu0
    %709 = vdwg.mxu0
    %s710 = scalar_lea.vmem [#allocation4], 16
    %711 = vst.msk [vmem:[%s710] sm:$0xff] %vm434, %v707
    %s712 = scalar_lea.vmem %s0, 48
    %v713 = vld [vmem:[%s712] sm:$0xff]
    %v714 = vld [vmem:[%s712 + $0x8] sm:$0xff]
    %v715 = vunpack.c.l.bf16 %v713
    %v716 = vunpack.c.h.bf16 %v713
    %v717 = vunpack.c.l.bf16 %v714
    %v718 = vunpack.c.h.bf16 %v714
    %719 = vmatpush.bf16.msra.mxu0 %v221
    %720 = vmatpush.bf16.msra.mxu0 %v217
    %721 = vmatpush.bf16.msra.mxu0 %v213
    %722 = vmatpush.bf16.msra.mxu0 %v209
    %723 = vmatpush.bf16.msra.mxu0 %v205
    %724 = vmatpush.bf16.msra.mxu0 %v201
    %725 = vmatpush.bf16.msra.mxu0 %v197
    %726 = vmatpush.bf16.msra.mxu0 %v193
    %727 = vmatmul.bf16.gmra.mxu0 %v696
    %v728 = vpop.f32.mrf.mxu0
    %v729 = vadd.f32 %v715, %v728
    %v730 = vpop.f32.mrf.mxu0
    %731 = vdwg.mxu0
    %732 = vmatpush.bf16.msra.mxu0 %v222
    %733 = vmatpush.bf16.msra.mxu0 %v218
    %734 = vmatpush.bf16.msra.mxu0 %v214
    %735 = vmatpush.bf16.msra.mxu0 %v210
    %736 = vmatpush.bf16.msra.mxu0 %v206
    %737 = vmatpush.bf16.msra.mxu0 %v202
    %738 = vmatpush.bf16.msra.mxu0 %v198
    %739 = vmatpush.bf16.msra.mxu0 %v194
    %740 = vmatmul.bf16.gmra.mxu0 %v696
    %v741 = vpop.f32.mrf.mxu0
    %v742 = vadd.f32 %v716, %v741
    %v743 = vpop.f32.mrf.mxu0
    %744 = vdwg.mxu0
    %745 = vmatpush.bf16.msra.mxu0 %v223
    %746 = vmatpush.bf16.msra.mxu0 %v219
    %747 = vmatpush.bf16.msra.mxu0 %v215
    %748 = vmatpush.bf16.msra.mxu0 %v211
    %749 = vmatpush.bf16.msra.mxu0 %v207
    %750 = vmatpush.bf16.msra.mxu0 %v203
    %751 = vmatpush.bf16.msra.mxu0 %v199
    %752 = vmatpush.bf16.msra.mxu0 %v195
    %753 = vmatmul.bf16.gmra.mxu0 %v696
    %v754 = vpop.f32.mrf.mxu0
    %v755 = vadd.f32 %v717, %v754
    %v756 = vpop.f32.mrf.mxu0
    %757 = vdwg.mxu0
    %758 = vmatpush.bf16.msra.mxu0 %v224
    %759 = vmatpush.bf16.msra.mxu0 %v220
    %760 = vmatpush.bf16.msra.mxu0 %v216
    %761 = vmatpush.bf16.msra.mxu0 %v212
    %762 = vmatpush.bf16.msra.mxu0 %v208
    %763 = vmatpush.bf16.msra.mxu0 %v204
    %764 = vmatpush.bf16.msra.mxu0 %v200
    %765 = vmatpush.bf16.msra.mxu0 %v196
    %766 = vmatmul.bf16.gmra.mxu0 %v696
    %v767 = vpop.f32.mrf.mxu0
    %v768 = vadd.f32 %v718, %v767
    %v769 = vpop.f32.mrf.mxu0
    %770 = vdwg.mxu0
    %v771 = vxor.u32 %v729, 2147483648
    %v772 = vxor.u32 %v742, 2147483648
    %v773 = vxor.u32 %v755, 2147483648
    %v774 = vmul.f32 %v771, 1.442695
    %v775 = vpow.pop %v774
    %v776 = vmul.f32 %v772, 1.442695
    %v777 = vpow.pop %v776
    %v778 = vmul.f32 %v773, 1.442695
    %v779 = vpow.pop %v778
    %v780 = vadd.f32 %v775, 1.0
    %v781 = vadd.f32 %v777, 1.0
    %v782 = vadd.f32 %v779, 1.0
    %v783 = vrcp.pop %v780
    %v784 = vmul.f32 %v780, %v783
    %v785 = vsub.f32 1.0, %v784
    %v786 = vmul.f32 %v783, %v785
    %v787 = vadd.f32 %v783, %v786
    %vm788 = vweird.f32 %v780
    %vm789 = vweird.f32 %v783
    %vm790 = vmor %vm788, %vm789
    %v791 = vsel %vm790, %v783, %v787
    %v792 = vand.u32 2147483647, %v780
    %vm793 = vcmp.eq.f32.partialorder %v792, 8.507059e+37
    %v794 = vand.u32 %v780, 2147483648
    %v795 = vor.u32 1.1754944e-38, %v794
    %v796 = vsel %vm793, %v795, %v791
    %v797 = vmul.f32 1.0, %v796
    %v798 = vrcp.pop %v781
    %v799 = vmul.f32 %v781, %v798
    %v800 = vsub.f32 1.0, %v799
    %v801 = vmul.f32 %v798, %v800
    %v802 = vadd.f32 %v798, %v801
    %vm803 = vweird.f32 %v781
    %vm804 = vweird.f32 %v798
    %vm805 = vmor %vm803, %vm804
    %v806 = vsel %vm805, %v798, %v802
    %v807 = vand.u32 2147483647, %v781
    %vm808 = vcmp.eq.f32.partialorder %v807, 8.507059e+37
    %v809 = vand.u32 %v781, 2147483648
    %v810 = vor.u32 1.1754944e-38, %v809
    %v811 = vsel %vm808, %v810, %v806
    %v812 = vmul.f32 1.0, %v811
    %v813 = vrcp.pop %v782
    %v814 = vmul.f32 %v782, %v813
    %v815 = vsub.f32 1.0, %v814
    %v816 = vmul.f32 %v813, %v815
    %v817 = vadd.f32 %v813, %v816
    %vm818 = vweird.f32 %v782
    %vm819 = vweird.f32 %v813
    %vm820 = vmor %vm818, %vm819
    %v821 = vsel %vm820, %v813, %v817
    %v822 = vand.u32 2147483647, %v782
    %vm823 = vcmp.eq.f32.partialorder %v822, 8.507059e+37
    %v824 = vand.u32 %v782, 2147483648
    %v825 = vor.u32 1.1754944e-38, %v824
    %v826 = vsel %vm823, %v825, %v821
    %v827 = vmul.f32 1.0, %v826
    %v828 = vtanh.pop %v768
    %v829 = vmul.f32 %v812, %v693
    %v830 = vmul.f32 %v797, %v828
    %v831 = vadd.f32 %v829, %v830
    %v832 = vtanh.pop %v831
    %v833 = vmul.f32 %v827, %v832
    %v834 = vpack.c.bf16 %v833, %v833
    %835 = vmatpush.bf16.msra.mxu0 %v412
    %836 = vmatpush.bf16.msra.mxu0 %v411
    %837 = vmatpush.bf16.msra.mxu0 %v410
    %838 = vmatpush.bf16.msra.mxu0 %v409
    %839 = vmatpush.bf16.msra.mxu0 %v408
    %840 = vmatpush.bf16.msra.mxu0 %v407
    %841 = vmatpush.bf16.msra.mxu0 %v406
    %842 = vmatpush.bf16.msra.mxu0 %v405
    %843 = vmatmul.bf16.gmra.mxu0 %v834
    %v844 = vpop.f32.mrf.mxu0
    %v845 = vadd.f32 %v86, %v844
    %v846 = vpop.f32.mrf.mxu0
    %847 = vdwg.mxu0
    %s848 = scalar_lea.vmem [#allocation4], 24
    %849 = vst.msk [vmem:[%s848] sm:$0xff] %vm434, %v845
    %s850 = scalar_lea.vmem %s0, 64
    %v851 = vld [vmem:[%s850] sm:$0xff]
    %v852 = vld [vmem:[%s850 + $0x8] sm:$0xff]
    %v853 = vunpack.c.l.bf16 %v851
    %v854 = vunpack.c.h.bf16 %v851
    %v855 = vunpack.c.l.bf16 %v852
    %v856 = vunpack.c.h.bf16 %v852
    %857 = vmatpush.bf16.msra.mxu0 %v221
    %858 = vmatpush.bf16.msra.mxu0 %v217
    %859 = vmatpush.bf16.msra.mxu0 %v213
    %860 = vmatpush.bf16.msra.mxu0 %v209
    %861 = vmatpush.bf16.msra.mxu0 %v205
    %862 = vmatpush.bf16.msra.mxu0 %v201
    %863 = vmatpush.bf16.msra.mxu0 %v197
    %864 = vmatpush.bf16.msra.mxu0 %v193
    %865 = vmatmul.bf16.gmra.mxu0 %v834
    %v866 = vpop.f32.mrf.mxu0
    %v867 = vadd.f32 %v853, %v866
    %v868 = vpop.f32.mrf.mxu0
    %869 = vdwg.mxu0
    %870 = vmatpush.bf16.msra.mxu0 %v222
    %871 = vmatpush.bf16.msra.mxu0 %v218
    %872 = vmatpush.bf16.msra.mxu0 %v214
    %873 = vmatpush.bf16.msra.mxu0 %v210
    %874 = vmatpush.bf16.msra.mxu0 %v206
    %875 = vmatpush.bf16.msra.mxu0 %v202
    %876 = vmatpush.bf16.msra.mxu0 %v198
    %877 = vmatpush.bf16.msra.mxu0 %v194
    %878 = vmatmul.bf16.gmra.mxu0 %v834
    %v879 = vpop.f32.mrf.mxu0
    %v880 = vadd.f32 %v854, %v879
    %v881 = vpop.f32.mrf.mxu0
    %882 = vdwg.mxu0
    %883 = vmatpush.bf16.msra.mxu0 %v223
    %884 = vmatpush.bf16.msra.mxu0 %v219
    %885 = vmatpush.bf16.msra.mxu0 %v215
    %886 = vmatpush.bf16.msra.mxu0 %v211
    %887 = vmatpush.bf16.msra.mxu0 %v207
    %888 = vmatpush.bf16.msra.mxu0 %v203
    %889 = vmatpush.bf16.msra.mxu0 %v199
    %890 = vmatpush.bf16.msra.mxu0 %v195
    %891 = vmatmul.bf16.gmra.mxu0 %v834
    %v892 = vpop.f32.mrf.mxu0
    %v893 = vadd.f32 %v855, %v892
    %v894 = vpop.f32.mrf.mxu0
    %895 = vdwg.mxu0
    %896 = vmatpush.bf16.msra.mxu0 %v224
    %897 = vmatpush.bf16.msra.mxu0 %v220
    %898 = vmatpush.bf16.msra.mxu0 %v216
    %899 = vmatpush.bf16.msra.mxu0 %v212
    %900 = vmatpush.bf16.msra.mxu0 %v208
    %901 = vmatpush.bf16.msra.mxu0 %v204
    %902 = vmatpush.bf16.msra.mxu0 %v200
    %903 = vmatpush.bf16.msra.mxu0 %v196
    %904 = vmatmul.bf16.gmra.mxu0 %v834
    %v905 = vpop.f32.mrf.mxu0
    %v906 = vadd.f32 %v856, %v905
    %v907 = vpop.f32.mrf.mxu0
    %908 = vdwg.mxu0
    %v909 = vxor.u32 %v867, 2147483648
    %v910 = vxor.u32 %v880, 2147483648
    %v911 = vxor.u32 %v893, 2147483648
    %v912 = vmul.f32 %v909, 1.442695
    %v913 = vpow.pop %v912
    %v914 = vmul.f32 %v910, 1.442695
    %v915 = vpow.pop %v914
    %v916 = vmul.f32 %v911, 1.442695
    %v917 = vpow.pop %v916
    %v918 = vadd.f32 %v913, 1.0
    %v919 = vadd.f32 %v915, 1.0
    %v920 = vadd.f32 %v917, 1.0
    %v921 = vrcp.pop %v918
    %v922 = vmul.f32 %v918, %v921
    %v923 = vsub.f32 1.0, %v922
    %v924 = vmul.f32 %v921, %v923
    %v925 = vadd.f32 %v921, %v924
    %vm926 = vweird.f32 %v918
    %vm927 = vweird.f32 %v921
    %vm928 = vmor %vm926, %vm927
    %v929 = vsel %vm928, %v921, %v925
    %v930 = vand.u32 2147483647, %v918
    %vm931 = vcmp.eq.f32.partialorder %v930, 8.507059e+37
    %v932 = vand.u32 %v918, 2147483648
    %v933 = vor.u32 1.1754944e-38, %v932
    %v934 = vsel %vm931, %v933, %v929
    %v935 = vmul.f32 1.0, %v934
    %v936 = vrcp.pop %v919
    %v937 = vmul.f32 %v919, %v936
    %v938 = vsub.f32 1.0, %v937
    %v939 = vmul.f32 %v936, %v938
    %v940 = vadd.f32 %v936, %v939
    %vm941 = vweird.f32 %v919
    %vm942 = vweird.f32 %v936
    %vm943 = vmor %vm941, %vm942
    %v944 = vsel %vm943, %v936, %v940
    %v945 = vand.u32 2147483647, %v919
    %vm946 = vcmp.eq.f32.partialorder %v945, 8.507059e+37
    %v947 = vand.u32 %v919, 2147483648
    %v948 = vor.u32 1.1754944e-38, %v947
    %v949 = vsel %vm946, %v948, %v944
    %v950 = vmul.f32 1.0, %v949
    %v951 = vrcp.pop %v920
    %v952 = vmul.f32 %v920, %v951
    %v953 = vsub.f32 1.0, %v952
    %v954 = vmul.f32 %v951, %v953
    %v955 = vadd.f32 %v951, %v954
    %vm956 = vweird.f32 %v920
    %vm957 = vweird.f32 %v951
    %vm958 = vmor %vm956, %vm957
    %v959 = vsel %vm958, %v951, %v955
    %v960 = vand.u32 2147483647, %v920
    %vm961 = vcmp.eq.f32.partialorder %v960, 8.507059e+37
    %v962 = vand.u32 %v920, 2147483648
    %v963 = vor.u32 1.1754944e-38, %v962
    %v964 = vsel %vm961, %v963, %v959
    %v965 = vmul.f32 1.0, %v964
    %v966 = vtanh.pop %v906
    %v967 = vmul.f32 %v950, %v831
    %v968 = vmul.f32 %v935, %v966
    %v969 = vadd.f32 %v967, %v968
    %v970 = vtanh.pop %v969
    %v971 = vmul.f32 %v965, %v970
    %v972 = vpack.c.bf16 %v971, %v971
    %973 = vmatpush.bf16.msra.mxu0 %v412
    %974 = vmatpush.bf16.msra.mxu0 %v411
    %975 = vmatpush.bf16.msra.mxu0 %v410
    %976 = vmatpush.bf16.msra.mxu0 %v409
    %977 = vmatpush.bf16.msra.mxu0 %v408
    %978 = vmatpush.bf16.msra.mxu0 %v407
    %979 = vmatpush.bf16.msra.mxu0 %v406
    %980 = vmatpush.bf16.msra.mxu0 %v405
    %981 = vmatmul.bf16.gmra.mxu0 %v972
    %v982 = vpop.f32.mrf.mxu0
    %v983 = vadd.f32 %v86, %v982
    %v984 = vpop.f32.mrf.mxu0
    %985 = vdwg.mxu0
    %s986 = scalar_lea.vmem [#allocation4], 32
    %987 = vst.msk [vmem:[%s986] sm:$0xff] %vm434, %v983
    %s988 = scalar_lea.vmem %s0, 80
    %v989 = vld [vmem:[%s988] sm:$0xff]
    %v990 = vld [vmem:[%s988 + $0x8] sm:$0xff]
    %v991 = vunpack.c.l.bf16 %v989
    %v992 = vunpack.c.h.bf16 %v989
    %v993 = vunpack.c.l.bf16 %v990
    %v994 = vunpack.c.h.bf16 %v990
    %995 = vmatpush.bf16.msra.mxu0 %v221
    %996 = vmatpush.bf16.msra.mxu0 %v217
    %997 = vmatpush.bf16.msra.mxu0 %v213
    %998 = vmatpush.bf16.msra.mxu0 %v209
    %999 = vmatpush.bf16.msra.mxu0 %v205
    %1000 = vmatpush.bf16.msra.mxu0 %v201
    %1001 = vmatpush.bf16.msra.mxu0 %v197
    %1002 = vmatpush.bf16.msra.mxu0 %v193
    %1003 = vmatmul.bf16.gmra.mxu0 %v972
    %v1004 = vpop.f32.mrf.mxu0
    %v1005 = vadd.f32 %v991, %v1004
    %v1006 = vpop.f32.mrf.mxu0
    %1007 = vdwg.mxu0
    %1008 = vmatpush.bf16.msra.mxu0 %v222
    %1009 = vmatpush.bf16.msra.mxu0 %v218
    %1010 = vmatpush.bf16.msra.mxu0 %v214
    %1011 = vmatpush.bf16.msra.mxu0 %v210
    %1012 = vmatpush.bf16.msra.mxu0 %v206
    %1013 = vmatpush.bf16.msra.mxu0 %v202
    %1014 = vmatpush.bf16.msra.mxu0 %v198
    %1015 = vmatpush.bf16.msra.mxu0 %v194
    %1016 = vmatmul.bf16.gmra.mxu0 %v972
    %v1017 = vpop.f32.mrf.mxu0
    %v1018 = vadd.f32 %v992, %v1017
    %v1019 = vpop.f32.mrf.mxu0
    %1020 = vdwg.mxu0
    %1021 = vmatpush.bf16.msra.mxu0 %v223
    %1022 = vmatpush.bf16.msra.mxu0 %v219
    %1023 = vmatpush.bf16.msra.mxu0 %v215
    %1024 = vmatpush.bf16.msra.mxu0 %v211
    %1025 = vmatpush.bf16.msra.mxu0 %v207
    %1026 = vmatpush.bf16.msra.mxu0 %v203
    %1027 = vmatpush.bf16.msra.mxu0 %v199
    %1028 = vmatpush.bf16.msra.mxu0 %v195
    %1029 = vmatmul.bf16.gmra.mxu0 %v972
    %v1030 = vpop.f32.mrf.mxu0
    %v1031 = vadd.f32 %v993, %v1030
    %v1032 = vpop.f32.mrf.mxu0
    %1033 = vdwg.mxu0
    %1034 = vmatpush.bf16.msra.mxu0 %v224
    %1035 = vmatpush.bf16.msra.mxu0 %v220
    %1036 = vmatpush.bf16.msra.mxu0 %v216
    %1037 = vmatpush.bf16.msra.mxu0 %v212
    %1038 = vmatpush.bf16.msra.mxu0 %v208
    %1039 = vmatpush.bf16.msra.mxu0 %v204
    %1040 = vmatpush.bf16.msra.mxu0 %v200
    %1041 = vmatpush.bf16.msra.mxu0 %v196
    %1042 = vmatmul.bf16.gmra.mxu0 %v972
    %v1043 = vpop.f32.mrf.mxu0
    %v1044 = vadd.f32 %v994, %v1043
    %v1045 = vpop.f32.mrf.mxu0
    %1046 = vdwg.mxu0
    %v1047 = vxor.u32 %v1005, 2147483648
    %v1048 = vxor.u32 %v1018, 2147483648
    %v1049 = vxor.u32 %v1031, 2147483648
    %v1050 = vmul.f32 %v1047, 1.442695
    %v1051 = vpow.pop %v1050
    %v1052 = vmul.f32 %v1048, 1.442695
    %v1053 = vpow.pop %v1052
    %v1054 = vmul.f32 %v1049, 1.442695
    %v1055 = vpow.pop %v1054
    %v1056 = vadd.f32 %v1051, 1.0
    %v1057 = vadd.f32 %v1053, 1.0
    %v1058 = vadd.f32 %v1055, 1.0
    %v1059 = vrcp.pop %v1056
    %v1060 = vmul.f32 %v1056, %v1059
    %v1061 = vsub.f32 1.0, %v1060
    %v1062 = vmul.f32 %v1059, %v1061
    %v1063 = vadd.f32 %v1059, %v1062
    %vm1064 = vweird.f32 %v1056
    %vm1065 = vweird.f32 %v1059
    %vm1066 = vmor %vm1064, %vm1065
    %v1067 = vsel %vm1066, %v1059, %v1063
    %v1068 = vand.u32 2147483647, %v1056
    %vm1069 = vcmp.eq.f32.partialorder %v1068, 8.507059e+37
    %v1070 = vand.u32 %v1056, 2147483648
    %v1071 = vor.u32 1.1754944e-38, %v1070
    %v1072 = vsel %vm1069, %v1071, %v1067
    %v1073 = vmul.f32 1.0, %v1072
    %v1074 = vrcp.pop %v1057
    %v1075 = vmul.f32 %v1057, %v1074
    %v1076 = vsub.f32 1.0, %v1075
    %v1077 = vmul.f32 %v1074, %v1076
    %v1078 = vadd.f32 %v1074, %v1077
    %vm1079 = vweird.f32 %v1057
    %vm1080 = vweird.f32 %v1074
    %vm1081 = vmor %vm1079, %vm1080
    %v1082 = vsel %vm1081, %v1074, %v1078
    %v1083 = vand.u32 2147483647, %v1057
    %vm1084 = vcmp.eq.f32.partialorder %v1083, 8.507059e+37
    %v1085 = vand.u32 %v1057, 2147483648
    %v1086 = vor.u32 1.1754944e-38, %v1085
    %v1087 = vsel %vm1084, %v1086, %v1082
    %v1088 = vmul.f32 1.0, %v1087
    %v1089 = vrcp.pop %v1058
    %v1090 = vmul.f32 %v1058, %v1089
    %v1091 = vsub.f32 1.0, %v1090
    %v1092 = vmul.f32 %v1089, %v1091
    %v1093 = vadd.f32 %v1089, %v1092
    %vm1094 = vweird.f32 %v1058
    %vm1095 = vweird.f32 %v1089
    %vm1096 = vmor %vm1094, %vm1095
    %v1097 = vsel %vm1096, %v1089, %v1093
    %v1098 = vand.u32 2147483647, %v1058
    %vm1099 = vcmp.eq.f32.partialorder %v1098, 8.507059e+37
    %v1100 = vand.u32 %v1058, 2147483648
    %v1101 = vor.u32 1.1754944e-38, %v1100
    %v1102 = vsel %vm1099, %v1101, %v1097
    %v1103 = vmul.f32 1.0, %v1102
    %v1104 = vtanh.pop %v1044
    %v1105 = vmul.f32 %v1088, %v969
    %v1106 = vmul.f32 %v1073, %v1104
    %v1107 = vadd.f32 %v1105, %v1106
    %v1108 = vtanh.pop %v1107
    %v1109 = vmul.f32 %v1103, %v1108
    %v1110 = vpack.c.bf16 %v1109, %v1109
    %1111 = vmatpush.bf16.msra.mxu0 %v412
    %1112 = vmatpush.bf16.msra.mxu0 %v411
    %1113 = vmatpush.bf16.msra.mxu0 %v410
    %1114 = vmatpush.bf16.msra.mxu0 %v409
    %1115 = vmatpush.bf16.msra.mxu0 %v408
    %1116 = vmatpush.bf16.msra.mxu0 %v407
    %1117 = vmatpush.bf16.msra.mxu0 %v406
    %1118 = vmatpush.bf16.msra.mxu0 %v405
    %1119 = vmatmul.bf16.gmra.mxu0 %v1110
    %v1120 = vpop.f32.mrf.mxu0
    %v1121 = vadd.f32 %v86, %v1120
    %v1122 = vpop.f32.mrf.mxu0
    %1123 = vdwg.mxu0
    %s1124 = scalar_lea.vmem [#allocation4], 40
    %1125 = vst.msk [vmem:[%s1124] sm:$0xff] %vm434, %v1121
    %s1126 = scalar_lea.vmem %s0, 96
    %v1127 = vld [vmem:[%s1126] sm:$0xff]
    %v1128 = vld [vmem:[%s1126 + $0x8] sm:$0xff]
    %v1129 = vunpack.c.l.bf16 %v1127
    %v1130 = vunpack.c.h.bf16 %v1127
    %v1131 = vunpack.c.l.bf16 %v1128
    %v1132 = vunpack.c.h.bf16 %v1128
    %1133 = vmatpush.bf16.msra.mxu0 %v221
    %1134 = vmatpush.bf16.msra.mxu0 %v217
    %1135 = vmatpush.bf16.msra.mxu0 %v213
    %1136 = vmatpush.bf16.msra.mxu0 %v209
    %1137 = vmatpush.bf16.msra.mxu0 %v205
    %1138 = vmatpush.bf16.msra.mxu0 %v201
    %1139 = vmatpush.bf16.msra.mxu0 %v197
    %1140 = vmatpush.bf16.msra.mxu0 %v193
    %1141 = vmatmul.bf16.gmra.mxu0 %v1110
    %v1142 = vpop.f32.mrf.mxu0
    %v1143 = vadd.f32 %v1129, %v1142
    %v1144 = vpop.f32.mrf.mxu0
    %1145 = vdwg.mxu0
    %1146 = vmatpush.bf16.msra.mxu0 %v222
    %1147 = vmatpush.bf16.msra.mxu0 %v218
    %1148 = vmatpush.bf16.msra.mxu0 %v214
    %1149 = vmatpush.bf16.msra.mxu0 %v210
    %1150 = vmatpush.bf16.msra.mxu0 %v206
    %1151 = vmatpush.bf16.msra.mxu0 %v202
    %1152 = vmatpush.bf16.msra.mxu0 %v198
    %1153 = vmatpush.bf16.msra.mxu0 %v194
    %1154 = vmatmul.bf16.gmra.mxu0 %v1110
    %v1155 = vpop.f32.mrf.mxu0
    %v1156 = vadd.f32 %v1130, %v1155
    %v1157 = vpop.f32.mrf.mxu0
    %1158 = vdwg.mxu0
    %1159 = vmatpush.bf16.msra.mxu0 %v223
    %1160 = vmatpush.bf16.msra.mxu0 %v219
    %1161 = vmatpush.bf16.msra.mxu0 %v215
    %1162 = vmatpush.bf16.msra.mxu0 %v211
    %1163 = vmatpush.bf16.msra.mxu0 %v207
    %1164 = vmatpush.bf16.msra.mxu0 %v203
    %1165 = vmatpush.bf16.msra.mxu0 %v199
    %1166 = vmatpush.bf16.msra.mxu0 %v195
    %1167 = vmatmul.bf16.gmra.mxu0 %v1110
    %v1168 = vpop.f32.mrf.mxu0
    %v1169 = vadd.f32 %v1131, %v1168
    %v1170 = vpop.f32.mrf.mxu0
    %1171 = vdwg.mxu0
    %1172 = vmatpush.bf16.msra.mxu0 %v224
    %1173 = vmatpush.bf16.msra.mxu0 %v220
    %1174 = vmatpush.bf16.msra.mxu0 %v216
    %1175 = vmatpush.bf16.msra.mxu0 %v212
    %1176 = vmatpush.bf16.msra.mxu0 %v208
    %1177 = vmatpush.bf16.msra.mxu0 %v204
    %1178 = vmatpush.bf16.msra.mxu0 %v200
    %1179 = vmatpush.bf16.msra.mxu0 %v196
    %1180 = vmatmul.bf16.gmra.mxu0 %v1110
    %v1181 = vpop.f32.mrf.mxu0
    %v1182 = vadd.f32 %v1132, %v1181
    %v1183 = vpop.f32.mrf.mxu0
    %1184 = vdwg.mxu0
    %v1185 = vxor.u32 %v1143, 2147483648
    %v1186 = vxor.u32 %v1156, 2147483648
    %v1187 = vxor.u32 %v1169, 2147483648
    %v1188 = vmul.f32 %v1185, 1.442695
    %v1189 = vpow.pop %v1188
    %v1190 = vmul.f32 %v1186, 1.442695
    %v1191 = vpow.pop %v1190
    %v1192 = vmul.f32 %v1187, 1.442695
    %v1193 = vpow.pop %v1192
    %v1194 = vadd.f32 %v1189, 1.0
    %v1195 = vadd.f32 %v1191, 1.0
    %v1196 = vadd.f32 %v1193, 1.0
    %v1197 = vrcp.pop %v1194
    %v1198 = vmul.f32 %v1194, %v1197
    %v1199 = vsub.f32 1.0, %v1198
    %v1200 = vmul.f32 %v1197, %v1199
    %v1201 = vadd.f32 %v1197, %v1200
    %vm1202 = vweird.f32 %v1194
    %vm1203 = vweird.f32 %v1197
    %vm1204 = vmor %vm1202, %vm1203
    %v1205 = vsel %vm1204, %v1197, %v1201
    %v1206 = vand.u32 2147483647, %v1194
    %vm1207 = vcmp.eq.f32.partialorder %v1206, 8.507059e+37
    %v1208 = vand.u32 %v1194, 2147483648
    %v1209 = vor.u32 1.1754944e-38, %v1208
    %v1210 = vsel %vm1207, %v1209, %v1205
    %v1211 = vmul.f32 1.0, %v1210
    %v1212 = vrcp.pop %v1195
    %v1213 = vmul.f32 %v1195, %v1212
    %v1214 = vsub.f32 1.0, %v1213
    %v1215 = vmul.f32 %v1212, %v1214
    %v1216 = vadd.f32 %v1212, %v1215
    %vm1217 = vweird.f32 %v1195
    %vm1218 = vweird.f32 %v1212
    %vm1219 = vmor %vm1217, %vm1218
    %v1220 = vsel %vm1219, %v1212, %v1216
    %v1221 = vand.u32 2147483647, %v1195
    %vm1222 = vcmp.eq.f32.partialorder %v1221, 8.507059e+37
    %v1223 = vand.u32 %v1195, 2147483648
    %v1224 = vor.u32 1.1754944e-38, %v1223
    %v1225 = vsel %vm1222, %v1224, %v1220
    %v1226 = vmul.f32 1.0, %v1225
    %v1227 = vrcp.pop %v1196
    %v1228 = vmul.f32 %v1196, %v1227
    %v1229 = vsub.f32 1.0, %v1228
    %v1230 = vmul.f32 %v1227, %v1229
    %v1231 = vadd.f32 %v1227, %v1230
    %vm1232 = vweird.f32 %v1196
    %vm1233 = vweird.f32 %v1227
    %vm1234 = vmor %vm1232, %vm1233
    %v1235 = vsel %vm1234, %v1227, %v1231
    %v1236 = vand.u32 2147483647, %v1196
    %vm1237 = vcmp.eq.f32.partialorder %v1236, 8.507059e+37
    %v1238 = vand.u32 %v1196, 2147483648
    %v1239 = vor.u32 1.1754944e-38, %v1238
    %v1240 = vsel %vm1237, %v1239, %v1235
    %v1241 = vmul.f32 1.0, %v1240
    %v1242 = vtanh.pop %v1182
    %v1243 = vmul.f32 %v1226, %v1107
    %v1244 = vmul.f32 %v1211, %v1242
    %v1245 = vadd.f32 %v1243, %v1244
    %v1246 = vtanh.pop %v1245
    %v1247 = vmul.f32 %v1241, %v1246
    %v1248 = vpack.c.bf16 %v1247, %v1247
    %1249 = vmatpush.bf16.msra.mxu0 %v412
    %1250 = vmatpush.bf16.msra.mxu0 %v411
    %1251 = vmatpush.bf16.msra.mxu0 %v410
    %1252 = vmatpush.bf16.msra.mxu0 %v409
    %1253 = vmatpush.bf16.msra.mxu0 %v408
    %1254 = vmatpush.bf16.msra.mxu0 %v407
    %1255 = vmatpush.bf16.msra.mxu0 %v406
    %1256 = vmatpush.bf16.msra.mxu0 %v405
    %1257 = vmatmul.bf16.gmra.mxu0 %v1248
    %v1258 = vpop.f32.mrf.mxu0
    %v1259 = vadd.f32 %v86, %v1258
    %v1260 = vpop.f32.mrf.mxu0
    %1261 = vdwg.mxu0
    %s1262 = scalar_lea.vmem [#allocation4], 48
    %1263 = vst.msk [vmem:[%s1262] sm:$0xff] %vm434, %v1259
    %s1264 = scalar_lea.vmem %s0, 112
    %v1265 = vld [vmem:[%s1264] sm:$0xff]
    %v1266 = vld [vmem:[%s1264 + $0x8] sm:$0xff]
    %v1267 = vunpack.c.l.bf16 %v1265
    %v1268 = vunpack.c.h.bf16 %v1265
    %v1269 = vunpack.c.l.bf16 %v1266
    %v1270 = vunpack.c.h.bf16 %v1266
    %1271 = vmatpush.bf16.msra.mxu0 %v221
    %1272 = vmatpush.bf16.msra.mxu0 %v217
    %1273 = vmatpush.bf16.msra.mxu0 %v213
    %1274 = vmatpush.bf16.msra.mxu0 %v209
    %1275 = vmatpush.bf16.msra.mxu0 %v205
    %1276 = vmatpush.bf16.msra.mxu0 %v201
    %1277 = vmatpush.bf16.msra.mxu0 %v197
    %1278 = vmatpush.bf16.msra.mxu0 %v193
    %1279 = vmatmul.bf16.gmra.mxu0 %v1248
    %v1280 = vpop.f32.mrf.mxu0
    %v1281 = vadd.f32 %v1267, %v1280
    %v1282 = vpop.f32.mrf.mxu0
    %1283 = vdwg.mxu0
    %1284 = vmatpush.bf16.msra.mxu0 %v222
    %1285 = vmatpush.bf16.msra.mxu0 %v218
    %1286 = vmatpush.bf16.msra.mxu0 %v214
    %1287 = vmatpush.bf16.msra.mxu0 %v210
    %1288 = vmatpush.bf16.msra.mxu0 %v206
    %1289 = vmatpush.bf16.msra.mxu0 %v202
    %1290 = vmatpush.bf16.msra.mxu0 %v198
    %1291 = vmatpush.bf16.msra.mxu0 %v194
    %1292 = vmatmul.bf16.gmra.mxu0 %v1248
    %v1293 = vpop.f32.mrf.mxu0
    %v1294 = vadd.f32 %v1268, %v1293
    %v1295 = vpop.f32.mrf.mxu0
    %1296 = vdwg.mxu0
    %1297 = vmatpush.bf16.msra.mxu0 %v223
    %1298 = vmatpush.bf16.msra.mxu0 %v219
    %1299 = vmatpush.bf16.msra.mxu0 %v215
    %1300 = vmatpush.bf16.msra.mxu0 %v211
    %1301 = vmatpush.bf16.msra.mxu0 %v207
    %1302 = vmatpush.bf16.msra.mxu0 %v203
    %1303 = vmatpush.bf16.msra.mxu0 %v199
    %1304 = vmatpush.bf16.msra.mxu0 %v195
    %1305 = vmatmul.bf16.gmra.mxu0 %v1248
    %v1306 = vpop.f32.mrf.mxu0
    %v1307 = vadd.f32 %v1269, %v1306
    %v1308 = vpop.f32.mrf.mxu0
    %1309 = vdwg.mxu0
    %1310 = vmatpush.bf16.msra.mxu0 %v224
    %1311 = vmatpush.bf16.msra.mxu0 %v220
    %1312 = vmatpush.bf16.msra.mxu0 %v216
    %1313 = vmatpush.bf16.msra.mxu0 %v212
    %1314 = vmatpush.bf16.msra.mxu0 %v208
    %1315 = vmatpush.bf16.msra.mxu0 %v204
    %1316 = vmatpush.bf16.msra.mxu0 %v200
    %1317 = vmatpush.bf16.msra.mxu0 %v196
    %1318 = vmatmul.bf16.gmra.mxu0 %v1248
    %v1319 = vpop.f32.mrf.mxu0
    %v1320 = vadd.f32 %v1270, %v1319
    %v1321 = vpop.f32.mrf.mxu0
    %1322 = vdwg.mxu0
    %v1323 = vxor.u32 %v1281, 2147483648
    %v1324 = vxor.u32 %v1294, 2147483648
    %v1325 = vxor.u32 %v1307, 2147483648
    %v1326 = vmul.f32 %v1323, 1.442695
    %v1327 = vpow.pop %v1326
    %v1328 = vmul.f32 %v1324, 1.442695
    %v1329 = vpow.pop %v1328
    %v1330 = vmul.f32 %v1325, 1.442695
    %v1331 = vpow.pop %v1330
    %v1332 = vadd.f32 %v1327, 1.0
    %v1333 = vadd.f32 %v1329, 1.0
    %v1334 = vadd.f32 %v1331, 1.0
    %v1335 = vrcp.pop %v1332
    %v1336 = vmul.f32 %v1332, %v1335
    %v1337 = vsub.f32 1.0, %v1336
    %v1338 = vmul.f32 %v1335, %v1337
    %v1339 = vadd.f32 %v1335, %v1338
    %vm1340 = vweird.f32 %v1332
    %vm1341 = vweird.f32 %v1335
    %vm1342 = vmor %vm1340, %vm1341
    %v1343 = vsel %vm1342, %v1335, %v1339
    %v1344 = vand.u32 2147483647, %v1332
    %vm1345 = vcmp.eq.f32.partialorder %v1344, 8.507059e+37
    %v1346 = vand.u32 %v1332, 2147483648
    %v1347 = vor.u32 1.1754944e-38, %v1346
    %v1348 = vsel %vm1345, %v1347, %v1343
    %v1349 = vmul.f32 1.0, %v1348
    %v1350 = vrcp.pop %v1333
    %v1351 = vmul.f32 %v1333, %v1350
    %v1352 = vsub.f32 1.0, %v1351
    %v1353 = vmul.f32 %v1350, %v1352
    %v1354 = vadd.f32 %v1350, %v1353
    %vm1355 = vweird.f32 %v1333
    %vm1356 = vweird.f32 %v1350
    %vm1357 = vmor %vm1355, %vm1356
    %v1358 = vsel %vm1357, %v1350, %v1354
    %v1359 = vand.u32 2147483647, %v1333
    %vm1360 = vcmp.eq.f32.partialorder %v1359, 8.507059e+37
    %v1361 = vand.u32 %v1333, 2147483648
    %v1362 = vor.u32 1.1754944e-38, %v1361
    %v1363 = vsel %vm1360, %v1362, %v1358
    %v1364 = vmul.f32 1.0, %v1363
    %v1365 = vrcp.pop %v1334
    %v1366 = vmul.f32 %v1334, %v1365
    %v1367 = vsub.f32 1.0, %v1366
    %v1368 = vmul.f32 %v1365, %v1367
    %v1369 = vadd.f32 %v1365, %v1368
    %vm1370 = vweird.f32 %v1334
    %vm1371 = vweird.f32 %v1365
    %vm1372 = vmor %vm1370, %vm1371
    %v1373 = vsel %vm1372, %v1365, %v1369
    %v1374 = vand.u32 2147483647, %v1334
    %vm1375 = vcmp.eq.f32.partialorder %v1374, 8.507059e+37
    %v1376 = vand.u32 %v1334, 2147483648
    %v1377 = vor.u32 1.1754944e-38, %v1376
    %v1378 = vsel %vm1375, %v1377, %v1373
    %v1379 = vmul.f32 1.0, %v1378
    %v1380 = vtanh.pop %v1320
    %v1381 = vmul.f32 %v1364, %v1245
    %v1382 = vmul.f32 %v1349, %v1380
    %v1383 = vadd.f32 %v1381, %v1382
    %v1384 = vtanh.pop %v1383
    %v1385 = vmul.f32 %v1379, %v1384
    %v1386 = vpack.c.bf16 %v1385, %v1385
    %1387 = vmatpush.bf16.msra.mxu0 %v412
    %1388 = vmatpush.bf16.msra.mxu0 %v411
    %1389 = vmatpush.bf16.msra.mxu0 %v410
    %1390 = vmatpush.bf16.msra.mxu0 %v409
    %1391 = vmatpush.bf16.msra.mxu0 %v408
    %1392 = vmatpush.bf16.msra.mxu0 %v407
    %1393 = vmatpush.bf16.msra.mxu0 %v406
    %1394 = vmatpush.bf16.msra.mxu0 %v405
    %1395 = vmatmul.bf16.gmra.mxu0 %v1386
    %v1396 = vpop.f32.mrf.mxu0
    %v1397 = vadd.f32 %v86, %v1396
    %v1398 = vpop.f32.mrf.mxu0
    %1399 = vdwg.mxu0
    %s1400 = scalar_lea.vmem [#allocation4], 56
    %1401 = vst.msk [vmem:[%s1400] sm:$0xff] %vm434, %v1397
    %1402 = vst [vmem:[#allocation2] sm:$0xff] %v1385
    %1403 = vst [vmem:[#allocation3] sm:$0xff] %v1383
    %1404 = vst [vmem:[#allocation6] sm:$0xff] %v1385
    %1405 = vst [vmem:[#allocation8] sm:$0xff] %v1383
    // Predicated region
    $region30: #{ptb_model_forward.1} parent=1 // pred_check
      _
    $region31: #{ptb_model_forward.1} parent=1 // pred_check_branch
      %1407 = sbr.rel (0) target = $region33
    $region32: #{ptb_model_forward.1} parent=1 // pred_region
      %1409 = vsyncadd [#allocation5], 0
      %s1410 = sshll.u32 [#allocation4], 4
      %s1411 = int_to_ptr.vmem [resolvable:$true] %s1410
      %s1412 = sshll.u32 %s6, 4
      %s1413 = int_to_ptr.hbm [resolvable:$true] %s1412
      %1418 = dma.vmem_to_hbm [thread:$0]  %s1411, 1024, %s1413, [#allocation5], 128, 128, 8
    $region33: #{ptb_model_forward.1} parent=1 // pred_fallthru
      _
    // Predicated region
    $region34: #{ptb_model_forward.1} parent=1 // pred_check
      _
    $region35: #{ptb_model_forward.1} parent=1 // pred_check_branch
      %1420 = sbr.rel (0) target = $region37
    $region36: #{ptb_model_forward.1} parent=1 // pred_region
      %1422 = vsyncadd [#allocation7], 0
      %s1424 = sshll.u32 [#allocation6], 4
      %s1425 = int_to_ptr.vmem [resolvable:$true] %s1424
      %s1426 = sshll.u32 %s7, 4
      %s1427 = int_to_ptr.hbm [resolvable:$true] %s1426
      %1429 = dma.vmem_to_hbm [thread:$0]  %s1425, 128, %s1427, [#allocation7]
    $region37: #{ptb_model_forward.1} parent=1 // pred_fallthru
      _
    // Predicated region
    $region38: #{ptb_model_forward.1} parent=1 // pred_check
      _
    $region39: #{ptb_model_forward.1} parent=1 // pred_check_branch
      %1431 = sbr.rel (0) target = $region41
    $region40: #{ptb_model_forward.1} parent=1 // pred_region
      %1433 = vsyncadd [#allocation7], 0
      %s1435 = sshll.u32 [#allocation8], 4
      %s1436 = int_to_ptr.vmem [resolvable:$true] %s1435
      %s1437 = sshll.u32 %s8, 4
      %s1438 = int_to_ptr.hbm [resolvable:$true] %s1437
      %1440 = dma.vmem_to_hbm [thread:$0]  %s1436, 128, %s1438, [#allocation7]
    $region41: #{ptb_model_forward.1} parent=1 // pred_fallthru
      _
    // Predicated region
    $region42: #{ptb_model_forward.1} parent=1 // pred_check
      _
    $region43: #{ptb_model_forward.1} parent=1 // pred_check_branch
      %1442 = sbr.rel (0) target = $region45
    $region44: #{ptb_model_forward.1} parent=1 // pred_region
      %1444 = dma.done [#allocation5], 1024
    $region45: #{ptb_model_forward.1} parent=1 // pred_fallthru
      _
    // Predicated region
    $region46: #{ptb_model_forward.1} parent=1 // pred_check
      _
    $region47: #{ptb_model_forward.1} parent=1 // pred_check_branch
      %1446 = sbr.rel (0) target = $region49
    $region48: #{ptb_model_forward.1} parent=1 // pred_region
      %1448 = dma.done [#allocation7], 128
    $region49: #{ptb_model_forward.1} parent=1 // pred_fallthru
      _
    // Predicated region
    $region50: #{ptb_model_forward.1} parent=1 // pred_check
      _
    $region51: #{ptb_model_forward.1} parent=1 // pred_check_branch
      %1450 = sbr.rel (0) target = $region53
    $region52: #{ptb_model_forward.1} parent=1 // pred_region
      %1452 = dma.done [#allocation7], 128
    $region53: #{ptb_model_forward.1} parent=1 // pred_fallthru
      _
    %1453 = vsyncpa [#allocation5], 1
    %1454 = vsyncpa [#allocation7], 1

</llo_original>
